<compile_context>
chip_gen: v6e
topology: v6e:2x2x1
jax: 0.10.0
libtpu: 0.0.40
codegen_flags: <defaults>
</compile_context>

<pallas_src>
import functools

import jax
import jax.numpy as jnp
import numpy as np
from jax import lax
from jax.experimental import pallas as pl
from jax.experimental.pallas import tpu as pltpu


def _gpn_kernel(x_ref, v0_ref, vreset_ref, wv_ref, wx_ref, b_ref,
                spike_ref, vout_ref, v_scr, xw_scr):
    # x_ref:      (Tc, Bb, C)  bf16   input chunk (leading-axis time index)
    # v0_ref:     (Bb, C)      f32    initial membrane potential block
    # vreset_ref: (Bb, C)      f32    reset potential block
    # wv_ref:     (C, 4C)      bf16   W^T rows multiplying v
    # wx_ref:     (C, 4C)      bf16   W^T rows multiplying x
    # b_ref:      (1, 4C)      f32    Linear bias
    # spike_ref:  (Tc, Bb, C)  bf16   output spikes chunk
    # vout_ref:   (Bb, C)      f32    final membrane potential (last chunk only)
    # v_scr:      (Bb, C)      f32    v carried across T chunks
    # xw_scr:     (Tc, Bb, 4C) f32    hoisted x@Wx + bias slab for this chunk
    tc = pl.program_id(1)
    n_tc = pl.num_programs(1)
    Tc, Bb, C = x_ref.shape
    C4 = wv_ref.shape[1]

    @pl.when(tc == 0)
    def _():
        v_scr[...] = v0_ref[...]

    # Hoisted, state-independent half of the Linear: one bf16 MXU matmul for
    # the whole chunk, accumulated in f32, staged in VMEM scratch.
    x_flat = x_ref[...].reshape(Tc * Bb, C)                         # bf16
    xw = jnp.dot(x_flat, wx_ref[...],
                 preferred_element_type=jnp.float32) + b_ref[...]   # (Tc*Bb,4C)
    xw_scr[...] = xw.reshape(Tc, Bb, C4)

    wv = wv_ref[...]                                                 # bf16
    v_reset = vreset_ref[...]                                        # f32

    def step(t, v):
        x_t = x_ref[t].astype(jnp.float32)                           # (Bb, C)
        cc = xw_scr[t] + jnp.dot(v.astype(jnp.bfloat16), wv,
                                 preferred_element_type=jnp.float32)  # (Bb, 4C)
        f = jax.nn.sigmoid(cc[:, 0:C])
        i = jax.nn.sigmoid(cc[:, C:2 * C])
        b_gate = jnp.tanh(cc[:, 2 * C:3 * C])
        t_gate = jax.nn.sigmoid(cc[:, 3 * C:4 * C])
        v_hidden = f * v + i * x_t
        spike = (v_hidden - t_gate >= 0.0).astype(jnp.float32)       # ATan fwd
        spike_ref[t] = spike.astype(spike_ref.dtype)
        return (1.0 - spike) * v_hidden + spike * v_reset + b_gate

    v = lax.fori_loop(0, Tc, step, v_scr[...], unroll=(Tc <= 8))
    v_scr[...] = v

    @pl.when(tc == n_tc - 1)
    def _():
        vout_ref[...] = v


def _pick_block(total, target, align):
    """Largest divisor of `total` that is <= target and `align`-aligned."""
    if total <= target:
        return total
    for cand in range(target, 0, -1):
        if total % cand == 0 and cand % align == 0:
            return cand
    return total  # full dim is always layout-legal


def _vmem_limit_bytes(tc, bb, c):
    weights = 2 * c * (4 * c) * 2          # wv + wx, bf16
    bias_b = 4 * c * 4
    x_chunk = 2 * tc * bb * c * 2          # double-buffered input chunk, bf16
    spk_chunk = 2 * tc * bb * c * 2        # double-buffered spike chunk, bf16
    xw = tc * bb * 4 * c * 4               # scratch slab, f32
    state = 6 * bb * c * 4                 # v scratch + v0/v_reset blocks + vout
    total = weights + bias_b + x_chunk + spk_chunk + xw + state
    return int(min(max(int(total * 1.5) + (4 << 20), 16 << 20), 100 << 20))


@functools.partial(jax.jit, static_argnames=("block_b", "block_t"))
def gpn_forward(x_seq, v0, v_reset, weight, bias, *, block_b=256, block_t=8):
    """Run T GPN forward() steps.

    x_seq:   (T, B, C) inputs (one module forward call per timestep).
    v0:      (B, C) initial membrane potential (== v_reset on the first call).
    v_reset: (B, C) reset potential.
    weight:  (4C, 2C) nn.Linear weight (PyTorch layout); bias: (4C,).
    Returns (spikes (T, B, C) bf16, v_final (B, C) f32).
    """
    T, B, C = x_seq.shape
    bb = _pick_block(B, block_b, 8)            # batch block (sublane-aligned)
    tcs = _pick_block(T, block_t, 1)           # T chunk (leading axis, any size)
    grid = (B // bb, T // tcs)

    wt = weight.T.astype(jnp.bfloat16)                     # (2C, 4C)
    wv, wx = wt[:C, :], wt[C:, :]                          # combined = [v, x]
    x_bf = x_seq.astype(jnp.bfloat16)                      # halves x DMA bytes
    bias2d = bias.reshape(1, 4 * C).astype(jnp.float32)

    return pl.pallas_call(
        _gpn_kernel,
        out_shape=(
            jax.ShapeDtypeStruct((T, B, C), jnp.bfloat16),   # spikes
            jax.ShapeDtypeStruct((B, C), jnp.float32),       # final v
        ),
        grid_spec=pltpu.PrefetchScalarGridSpec(
            num_scalar_prefetch=0,
            grid=grid,
            in_specs=[
                pl.BlockSpec((tcs, bb, C), lambda b, t: (t, b, 0)),   # x
                pl.BlockSpec((bb, C), lambda b, t: (b, 0)),           # v0
                pl.BlockSpec((bb, C), lambda b, t: (b, 0)),           # v_reset
                pl.BlockSpec((C, 4 * C), lambda b, t: (0, 0)),        # wv
                pl.BlockSpec((C, 4 * C), lambda b, t: (0, 0)),        # wx
                pl.BlockSpec((1, 4 * C), lambda b, t: (0, 0)),        # bias
            ],
            out_specs=[
                pl.BlockSpec((tcs, bb, C), lambda b, t: (t, b, 0)),   # spikes
                pl.BlockSpec((bb, C), lambda b, t: (b, 0)),           # v_final
            ],
            scratch_shapes=[
                pltpu.VMEM((bb, C), jnp.float32),            # v carry
                pltpu.VMEM((tcs, bb, 4 * C), jnp.float32),   # xw slab
            ],
        ),
        compiler_params=pltpu.CompilerParams(
            dimension_semantics=("parallel", "arbitrary"),
            vmem_limit_bytes=_vmem_limit_bytes(tcs, bb, C),
        ),
    )(x_bf, v0.astype(jnp.float32), v_reset.astype(jnp.float32),
      wv, wx, bias2d)


def gpn_reference(x_seq, v0, v_reset, weight, bias):
    """Pure-JAX reference mirroring the PyTorch forward (same bf16 matmul
    precision as the kernel so the hard spike threshold compares cleanly)."""
    T, B, C = x_seq.shape
    wt = weight.T.astype(jnp.bfloat16)
    wv, wx = wt[:C, :], wt[C:, :]
    x_bf = x_seq.astype(jnp.bfloat16)
    bias_f = bias.astype(jnp.float32)[None, :]
    v = v0.astype(jnp.float32)
    spikes = []
    for t in range(T):
        x = x_bf[t].astype(jnp.float32)
        cc = (jnp.dot(x_bf[t], wx, preferred_element_type=jnp.float32) + bias_f
              + jnp.dot(v.astype(jnp.bfloat16), wv,
                        preferred_element_type=jnp.float32))
        f = jax.nn.sigmoid(cc[:, 0:C])
        i = jax.nn.sigmoid(cc[:, C:2 * C])
        b_gate = jnp.tanh(cc[:, 2 * C:3 * C])
        t_gate = jax.nn.sigmoid(cc[:, 3 * C:4 * C])
        v_hidden = f * v + i * x
        spike = (v_hidden - t_gate >= 0.0).astype(jnp.float32)
        v = (1.0 - spike) * v_hidden + spike * v_reset + b_gate
        spikes.append(spike)
    return jnp.stack(spikes, axis=0), v


if __name__ == "__main__":
    # Small test shapes (module default is input_channels=1024); block sizes
    # chosen so the grid exercises multiple batch blocks AND multiple T chunks.
    T, B, C = 8, 16, 128

    key = jax.random.PRNGKey(0)
    k_x, k_w, k_b, k_vr = jax.random.split(key, 4)
    x_seq = jax.random.normal(k_x, (T, B, C), dtype=jnp.float32)
    weight = 0.2 * jax.random.normal(k_w, (4 * C, 2 * C), dtype=jnp.float32)
    bias = 0.1 * jax.random.normal(k_b, (4 * C,), dtype=jnp.float32)

    # First-call state init (training-mode v_reset ~ N(0, 0.05) done host-side
    # with a deterministic JAX key instead of torch.normal; v = v_reset).
    v_reset = 0.05 * jax.random.normal(k_vr, (B, C), dtype=jnp.float32)
    v0 = v_reset

    spikes, v_final = gpn_forward(x_seq, v0, v_reset, weight, bias,
                                  block_b=8, block_t=4)   # grid = (2, 2)
    spikes = jax.block_until_ready(spikes)
    v_final = jax.block_until_ready(v_final)

    spikes_ref, v_ref = gpn_reference(x_seq, v0, v_reset, weight, bias)

    # Hard-threshold spikes: compare with a mismatch-rate budget (a flip near
    # the threshold propagates into v), and gate v_final on large errors.
    spk_k = np.asarray(spikes, dtype=np.float32)
    spk_r = np.asarray(spikes_ref, dtype=np.float32)
    mismatch = float(np.mean(spk_k != spk_r))
    assert mismatch <= 2e-3, f"spike mismatch rate {mismatch:.4%}"

    v_k = np.asarray(v_final, dtype=np.float32)
    v_r = np.asarray(v_ref, dtype=np.float32)
    bad_frac = float(np.mean(np.abs(v_k - v_r) > 5e-2))
    assert bad_frac <= 2e-3, f"v_final large-error fraction {bad_frac:.4%}"

    print("KERNEL_OK")
</pallas_src>

<mosaic_0001>
module attributes {stable_mosaic.version = 11 : i64} {
  func.func @_gpn_kernel(%arg0: i32, %arg1: i32, %arg2: memref<4x8x128xbf16, #tpu.memory_space<vmem>>, %arg3: memref<8x128xf32, #tpu.memory_space<vmem>>, %arg4: memref<8x128xf32, #tpu.memory_space<vmem>>, %arg5: memref<128x512xbf16, #tpu.memory_space<vmem>>, %arg6: memref<128x512xbf16, #tpu.memory_space<vmem>>, %arg7: memref<1x512xf32, #tpu.memory_space<vmem>>, %arg8: memref<4x8x128xbf16, #tpu.memory_space<vmem>>, %arg9: memref<8x128xf32, #tpu.memory_space<vmem>>, %arg10: memref<8x128xf32, #tpu.memory_space<vmem>>, %arg11: memref<4x8x512xf32, #tpu.memory_space<vmem>>) attributes {dimension_semantics = [#tpu.dimension_semantics<parallel>, #tpu.dimension_semantics<arbitrary>], iteration_bounds = array<i64: 2, 2>, scalar_prefetch = 0 : i64, scratch_operands = 2 : i64, tpu.core_type = #tpu.core_type<tc>, window_params = [{transform_indices = @transform_0, window_bounds = array<i64: 4, 8, 128>}, {transform_indices = @transform_1, window_bounds = array<i64: 8, 128>}, {transform_indices = @transform_2, window_bounds = array<i64: 8, 128>}, {pipeline_mode = #tpu.pipeline_mode<synchronous>, transform_indices = @transform_3, window_bounds = array<i64: 128, 512>}, {pipeline_mode = #tpu.pipeline_mode<synchronous>, transform_indices = @transform_4, window_bounds = array<i64: 128, 512>}, {pipeline_mode = #tpu.pipeline_mode<synchronous>, transform_indices = @transform_5, window_bounds = array<i64: 1, 512>}, {transform_indices = @transform_6, window_bounds = array<i64: 4, 8, 128>}, {transform_indices = @transform_7, window_bounds = array<i64: 8, 128>}]} {
    %c0_i32 = arith.constant 0 : i32
    %0 = arith.cmpi eq, %arg1, %c0_i32 : i32
    %1 = arith.extui %0 : i1 to i32
    %c0_i32_0 = arith.constant 0 : i32
    %2 = arith.cmpi ne, %1, %c0_i32_0 : i32
    scf.if %2 {
      %c0_69 = arith.constant 0 : index
      %c0_70 = arith.constant 0 : index
      %215 = vector.load %arg3[%c0_69, %c0_70] : memref<8x128xf32, #tpu.memory_space<vmem>>, vector<8x128xf32>
      %c0_71 = arith.constant 0 : index
      %c0_72 = arith.constant 0 : index
      %216 = vector.load %arg10[%c0_71, %c0_72] : memref<8x128xf32, #tpu.memory_space<vmem>>, vector<8x128xf32>
      tpu.vector_store %arg10[%c0_71, %c0_72], %215 {strides = array<i32>} : memref<8x128xf32, #tpu.memory_space<vmem>>, vector<8x128xf32>,
    } else {
    }
    %c0 = arith.constant 0 : index
    %c0_1 = arith.constant 0 : index
    %c0_2 = arith.constant 0 : index
    %3 = vector.load %arg2[%c0, %c0_1, %c0_2] : memref<4x8x128xbf16, #tpu.memory_space<vmem>>, vector<4x8x128xbf16>
    %4 = vector.shape_cast %3 : vector<4x8x128xbf16> to vector<32x128xbf16>
    %c0_3 = arith.constant 0 : index
    %c0_4 = arith.constant 0 : index
    %5 = vector.load %arg6[%c0_3, %c0_4] : memref<128x512xbf16, #tpu.memory_space<vmem>>, vector<128x512xbf16>
    %cst = arith.constant dense<0.000000e+00> : vector<32x512xf32>
    %6 = tpu.matmul %4, %5, %cst {dimension_numbers = #tpu.dot_dimension_numbers<[1], [0], [0], [1], [0, 0, 1, 1], [], []>} : vector<32x128xbf16>, vector<128x512xbf16>, vector<32x512xf32> -> vector<32x512xf32>
    %c0_5 = arith.constant 0 : index
    %c0_6 = arith.constant 0 : index
    %7 = vector.load %arg7[%c0_5, %c0_6] : memref<1x512xf32, #tpu.memory_space<vmem>>, vector<1x512xf32>
    %8 = vector.broadcast %7 : vector<1x512xf32> to vector<32x512xf32>
    %9 = arith.addf %6, %8 : vector<32x512xf32>
    %10 = vector.shape_cast %9 : vector<32x512xf32> to vector<4x8x512xf32>
    %c0_7 = arith.constant 0 : index
    %c0_8 = arith.constant 0 : index
    %c0_9 = arith.constant 0 : index
    %11 = vector.load %arg11[%c0_7, %c0_8, %c0_9] : memref<4x8x512xf32, #tpu.memory_space<vmem>>, vector<4x8x512xf32>
    tpu.vector_store %arg11[%c0_7, %c0_8, %c0_9], %10 {strides = array<i32>} : memref<4x8x512xf32, #tpu.memory_space<vmem>>, vector<4x8x512xf32>,
    %c0_10 = arith.constant 0 : index
    %c0_11 = arith.constant 0 : index
    %12 = vector.load %arg5[%c0_10, %c0_11] : memref<128x512xbf16, #tpu.memory_space<vmem>>, vector<128x512xbf16>
    %c0_12 = arith.constant 0 : index
    %c0_13 = arith.constant 0 : index
    %13 = vector.load %arg4[%c0_12, %c0_13] : memref<8x128xf32, #tpu.memory_space<vmem>>, vector<8x128xf32>
    %c0_14 = arith.constant 0 : index
    %c0_15 = arith.constant 0 : index
    %14 = vector.load %arg10[%c0_14, %c0_15] : memref<8x128xf32, #tpu.memory_space<vmem>>, vector<8x128xf32>
    %c0_i32_16 = arith.constant 0 : i32
    %15 = arith.index_cast %c0_i32_16 : i32 to index
    %c0_17 = arith.constant 0 : index
    %c0_18 = arith.constant 0 : index
    %16 = vector.load %arg2[%15, %c0_17, %c0_18] : memref<4x8x128xbf16, #tpu.memory_space<vmem>>, vector<1x8x128xbf16>
    %17 = vector.shape_cast %16 : vector<1x8x128xbf16> to vector<8x128xbf16>
    %18 = arith.extf %17 : vector<8x128xbf16> to vector<8x128xf32>
    %19 = arith.index_cast %c0_i32_16 : i32 to index
    %c0_19 = arith.constant 0 : index
    %c0_20 = arith.constant 0 : index
    %20 = vector.load %arg11[%19, %c0_19, %c0_20] : memref<4x8x512xf32, #tpu.memory_space<vmem>>, vector<1x8x512xf32>
    %21 = vector.shape_cast %20 : vector<1x8x512xf32> to vector<8x512xf32>
    %22 = arith.truncf %14 : vector<8x128xf32> to vector<8x128xbf16>
    %cst_21 = arith.constant dense<0.000000e+00> : vector<8x512xf32>
    %23 = tpu.matmul %22, %12, %cst_21 {dimension_numbers = #tpu.dot_dimension_numbers<[1], [0], [0], [1], [0, 0, 1, 1], [], []>} : vector<8x128xbf16>, vector<128x512xbf16>, vector<8x512xf32> -> vector<8x512xf32>
    %24 = arith.addf %21, %23 : vector<8x512xf32>
    %25 = vector.extract_strided_slice %24 {offsets = [0, 0], sizes = [8, 128], strides = [1, 1]} : vector<8x512xf32> to vector<8x128xf32>
    %26 = arith.negf %25 : vector<8x128xf32>
    %27 = math.exp %26 : vector<8x128xf32>
    %cst_22 = arith.constant 1.000000e+00 : f32
    %28 = vector.broadcast %cst_22 : f32 to vector<8x128xf32>
    %29 = arith.addf %28, %27 : vector<8x128xf32>
    %30 = arith.divf %28, %29 : vector<8x128xf32>
    %31 = vector.extract_strided_slice %24 {offsets = [0, 128], sizes = [8, 128], strides = [1, 1]} : vector<8x512xf32> to vector<8x128xf32>
    %32 = arith.negf %31 : vector<8x128xf32>
    %33 = math.exp %32 : vector<8x128xf32>
    %cst_23 = arith.constant 1.000000e+00 : f32
    %34 = vector.broadcast %cst_23 : f32 to vector<8x128xf32>
    %35 = arith.addf %34, %33 : vector<8x128xf32>
    %36 = arith.divf %34, %35 : vector<8x128xf32>
    %37 = vector.extract_strided_slice %24 {offsets = [0, 256], sizes = [8, 128], strides = [1, 1]} : vector<8x512xf32> to vector<8x128xf32>
    %38 = math.tanh %37 : vector<8x128xf32>
    %39 = vector.extract_strided_slice %24 {offsets = [0, 384], sizes = [8, 128], strides = [1, 1]} : vector<8x512xf32> to vector<8x128xf32>
    %40 = arith.negf %39 : vector<8x128xf32>
    %41 = math.exp %40 : vector<8x128xf32>
    %cst_24 = arith.constant 1.000000e+00 : f32
    %42 = vector.broadcast %cst_24 : f32 to vector<8x128xf32>
    %43 = arith.addf %42, %41 : vector<8x128xf32>
    %44 = arith.divf %42, %43 : vector<8x128xf32>
    %45 = arith.mulf %30, %14 : vector<8x128xf32>
    %46 = arith.mulf %36, %18 : vector<8x128xf32>
    %47 = arith.addf %45, %46 : vector<8x128xf32>
    %48 = arith.subf %47, %44 : vector<8x128xf32>
    %cst_25 = arith.constant 0.000000e+00 : f32
    %49 = vector.broadcast %cst_25 : f32 to vector<8x128xf32>
    %50 = arith.cmpf oge, %48, %49 : vector<8x128xf32>
    %51 = arith.extui %50 : vector<8x128xi1> to vector<8x128xi32>
    %52 = arith.sitofp %51 : vector<8x128xi32> to vector<8x128xf32>
    %53 = arith.truncf %52 : vector<8x128xf32> to vector<8x128xbf16>
    %54 = arith.index_cast %c0_i32_16 : i32 to index
    %c0_26 = arith.constant 0 : index
    %c0_27 = arith.constant 0 : index
    %55 = vector.load %arg8[%54, %c0_26, %c0_27] : memref<4x8x128xbf16, #tpu.memory_space<vmem>>, vector<1x8x128xbf16>
    %56 = vector.shape_cast %55 : vector<1x8x128xbf16> to vector<8x128xbf16>
    %57 = vector.shape_cast %53 : vector<8x128xbf16> to vector<1x8x128xbf16>
    tpu.vector_store %arg8[%54, %c0_26, %c0_27], %57 {strides = array<i32>} : memref<4x8x128xbf16, #tpu.memory_space<vmem>>, vector<1x8x128xbf16>,
    %cst_28 = arith.constant 1.000000e+00 : f32
    %58 = vector.broadcast %cst_28 : f32 to vector<8x128xf32>
    %59 = arith.subf %58, %52 : vector<8x128xf32>
    %60 = arith.mulf %59, %47 : vector<8x128xf32>
    %61 = arith.mulf %52, %13 : vector<8x128xf32>
    %62 = arith.addf %60, %61 : vector<8x128xf32>
    %63 = arith.addf %62, %38 : vector<8x128xf32>
    %c1_i32 = arith.constant 1 : i32
    %64 = arith.index_cast %c1_i32 : i32 to index
    %c0_29 = arith.constant 0 : index
    %c0_30 = arith.constant 0 : index
    %65 = vector.load %arg2[%64, %c0_29, %c0_30] : memref<4x8x128xbf16, #tpu.memory_space<vmem>>, vector<1x8x128xbf16>
    %66 = vector.shape_cast %65 : vector<1x8x128xbf16> to vector<8x128xbf16>
    %67 = arith.extf %66 : vector<8x128xbf16> to vector<8x128xf32>
    %68 = arith.index_cast %c1_i32 : i32 to index
    %c0_31 = arith.constant 0 : index
    %c0_32 = arith.constant 0 : index
    %69 = vector.load %arg11[%68, %c0_31, %c0_32] : memref<4x8x512xf32, #tpu.memory_space<vmem>>, vector<1x8x512xf32>
    %70 = vector.shape_cast %69 : vector<1x8x512xf32> to vector<8x512xf32>
    %71 = arith.truncf %63 : vector<8x128xf32> to vector<8x128xbf16>
    %cst_33 = arith.constant dense<0.000000e+00> : vector<8x512xf32>
    %72 = tpu.matmul %71, %12, %cst_33 {dimension_numbers = #tpu.dot_dimension_numbers<[1], [0], [0], [1], [0, 0, 1, 1], [], []>} : vector<8x128xbf16>, vector<128x512xbf16>, vector<8x512xf32> -> vector<8x512xf32>
    %73 = arith.addf %70, %72 : vector<8x512xf32>
    %74 = vector.extract_strided_slice %73 {offsets = [0, 0], sizes = [8, 128], strides = [1, 1]} : vector<8x512xf32> to vector<8x128xf32>
    %75 = arith.negf %74 : vector<8x128xf32>
    %76 = math.exp %75 : vector<8x128xf32>
    %cst_34 = arith.constant 1.000000e+00 : f32
    %77 = vector.broadcast %cst_34 : f32 to vector<8x128xf32>
    %78 = arith.addf %77, %76 : vector<8x128xf32>
    %79 = arith.divf %77, %78 : vector<8x128xf32>
    %80 = vector.extract_strided_slice %73 {offsets = [0, 128], sizes = [8, 128], strides = [1, 1]} : vector<8x512xf32> to vector<8x128xf32>
    %81 = arith.negf %80 : vector<8x128xf32>
    %82 = math.exp %81 : vector<8x128xf32>
    %cst_35 = arith.constant 1.000000e+00 : f32
    %83 = vector.broadcast %cst_35 : f32 to vector<8x128xf32>
    %84 = arith.addf %83, %82 : vector<8x128xf32>
    %85 = arith.divf %83, %84 : vector<8x128xf32>
    %86 = vector.extract_strided_slice %73 {offsets = [0, 256], sizes = [8, 128], strides = [1, 1]} : vector<8x512xf32> to vector<8x128xf32>
    %87 = math.tanh %86 : vector<8x128xf32>
    %88 = vector.extract_strided_slice %73 {offsets = [0, 384], sizes = [8, 128], strides = [1, 1]} : vector<8x512xf32> to vector<8x128xf32>
    %89 = arith.negf %88 : vector<8x128xf32>
    %90 = math.exp %89 : vector<8x128xf32>
    %cst_36 = arith.constant 1.000000e+00 : f32
    %91 = vector.broadcast %cst_36 : f32 to vector<8x128xf32>
    %92 = arith.addf %91, %90 : vector<8x128xf32>
    %93 = arith.divf %91, %92 : vector<8x128xf32>
    %94 = arith.mulf %79, %63 : vector<8x128xf32>
    %95 = arith.mulf %85, %67 : vector<8x128xf32>
    %96 = arith.addf %94, %95 : vector<8x128xf32>
    %97 = arith.subf %96, %93 : vector<8x128xf32>
    %cst_37 = arith.constant 0.000000e+00 : f32
    %98 = vector.broadcast %cst_37 : f32 to vector<8x128xf32>
    %99 = arith.cmpf oge, %97, %98 : vector<8x128xf32>
    %100 = arith.extui %99 : vector<8x128xi1> to vector<8x128xi32>
    %101 = arith.sitofp %100 : vector<8x128xi32> to vector<8x128xf32>
    %102 = arith.truncf %101 : vector<8x128xf32> to vector<8x128xbf16>
    %103 = arith.index_cast %c1_i32 : i32 to index
    %c0_38 = arith.constant 0 : index
    %c0_39 = arith.constant 0 : index
    %104 = vector.load %arg8[%103, %c0_38, %c0_39] : memref<4x8x128xbf16, #tpu.memory_space<vmem>>, vector<1x8x128xbf16>
    %105 = vector.shape_cast %104 : vector<1x8x128xbf16> to vector<8x128xbf16>
    %106 = vector.shape_cast %102 : vector<8x128xbf16> to vector<1x8x128xbf16>
    tpu.vector_store %arg8[%103, %c0_38, %c0_39], %106 {strides = array<i32>} : memref<4x8x128xbf16, #tpu.memory_space<vmem>>, vector<1x8x128xbf16>,
    %cst_40 = arith.constant 1.000000e+00 : f32
    %107 = vector.broadcast %cst_40 : f32 to vector<8x128xf32>
    %108 = arith.subf %107, %101 : vector<8x128xf32>
    %109 = arith.mulf %108, %96 : vector<8x128xf32>
    %110 = arith.mulf %101, %13 : vector<8x128xf32>
    %111 = arith.addf %109, %110 : vector<8x128xf32>
    %112 = arith.addf %111, %87 : vector<8x128xf32>
    %c2_i32 = arith.constant 2 : i32
    %113 = arith.index_cast %c2_i32 : i32 to index
    %c0_41 = arith.constant 0 : index
    %c0_42 = arith.constant 0 : index
    %114 = vector.load %arg2[%113, %c0_41, %c0_42] : memref<4x8x128xbf16, #tpu.memory_space<vmem>>, vector<1x8x128xbf16>
    %115 = vector.shape_cast %114 : vector<1x8x128xbf16> to vector<8x128xbf16>
    %116 = arith.extf %115 : vector<8x128xbf16> to vector<8x128xf32>
    %117 = arith.index_cast %c2_i32 : i32 to index
    %c0_43 = arith.constant 0 : index
    %c0_44 = arith.constant 0 : index
    %118 = vector.load %arg11[%117, %c0_43, %c0_44] : memref<4x8x512xf32, #tpu.memory_space<vmem>>, vector<1x8x512xf32>
    %119 = vector.shape_cast %118 : vector<1x8x512xf32> to vector<8x512xf32>
    %120 = arith.truncf %112 : vector<8x128xf32> to vector<8x128xbf16>
    %cst_45 = arith.constant dense<0.000000e+00> : vector<8x512xf32>
    %121 = tpu.matmul %120, %12, %cst_45 {dimension_numbers = #tpu.dot_dimension_numbers<[1], [0], [0], [1], [0, 0, 1, 1], [], []>} : vector<8x128xbf16>, vector<128x512xbf16>, vector<8x512xf32> -> vector<8x512xf32>
    %122 = arith.addf %119, %121 : vector<8x512xf32>
    %123 = vector.extract_strided_slice %122 {offsets = [0, 0], sizes = [8, 128], strides = [1, 1]} : vector<8x512xf32> to vector<8x128xf32>
    %124 = arith.negf %123 : vector<8x128xf32>
    %125 = math.exp %124 : vector<8x128xf32>
    %cst_46 = arith.constant 1.000000e+00 : f32
    %126 = vector.broadcast %cst_46 : f32 to vector<8x128xf32>
    %127 = arith.addf %126, %125 : vector<8x128xf32>
    %128 = arith.divf %126, %127 : vector<8x128xf32>
    %129 = vector.extract_strided_slice %122 {offsets = [0, 128], sizes = [8, 128], strides = [1, 1]} : vector<8x512xf32> to vector<8x128xf32>
    %130 = arith.negf %129 : vector<8x128xf32>
    %131 = math.exp %130 : vector<8x128xf32>
    %cst_47 = arith.constant 1.000000e+00 : f32
    %132 = vector.broadcast %cst_47 : f32 to vector<8x128xf32>
    %133 = arith.addf %132, %131 : vector<8x128xf32>
    %134 = arith.divf %132, %133 : vector<8x128xf32>
    %135 = vector.extract_strided_slice %122 {offsets = [0, 256], sizes = [8, 128], strides = [1, 1]} : vector<8x512xf32> to vector<8x128xf32>
    %136 = math.tanh %135 : vector<8x128xf32>
    %137 = vector.extract_strided_slice %122 {offsets = [0, 384], sizes = [8, 128], strides = [1, 1]} : vector<8x512xf32> to vector<8x128xf32>
    %138 = arith.negf %137 : vector<8x128xf32>
    %139 = math.exp %138 : vector<8x128xf32>
    %cst_48 = arith.constant 1.000000e+00 : f32
    %140 = vector.broadcast %cst_48 : f32 to vector<8x128xf32>
    %141 = arith.addf %140, %139 : vector<8x128xf32>
    %142 = arith.divf %140, %141 : vector<8x128xf32>
    %143 = arith.mulf %128, %112 : vector<8x128xf32>
    %144 = arith.mulf %134, %116 : vector<8x128xf32>
    %145 = arith.addf %143, %144 : vector<8x128xf32>
    %146 = arith.subf %145, %142 : vector<8x128xf32>
    %cst_49 = arith.constant 0.000000e+00 : f32
    %147 = vector.broadcast %cst_49 : f32 to vector<8x128xf32>
    %148 = arith.cmpf oge, %146, %147 : vector<8x128xf32>
    %149 = arith.extui %148 : vector<8x128xi1> to vector<8x128xi32>
    %150 = arith.sitofp %149 : vector<8x128xi32> to vector<8x128xf32>
    %151 = arith.truncf %150 : vector<8x128xf32> to vector<8x128xbf16>
    %152 = arith.index_cast %c2_i32 : i32 to index
    %c0_50 = arith.constant 0 : index
    %c0_51 = arith.constant 0 : index
    %153 = vector.load %arg8[%152, %c0_50, %c0_51] : memref<4x8x128xbf16, #tpu.memory_space<vmem>>, vector<1x8x128xbf16>
    %154 = vector.shape_cast %153 : vector<1x8x128xbf16> to vector<8x128xbf16>
    %155 = vector.shape_cast %151 : vector<8x128xbf16> to vector<1x8x128xbf16>
    tpu.vector_store %arg8[%152, %c0_50, %c0_51], %155 {strides = array<i32>} : memref<4x8x128xbf16, #tpu.memory_space<vmem>>, vector<1x8x128xbf16>,
    %cst_52 = arith.constant 1.000000e+00 : f32
    %156 = vector.broadcast %cst_52 : f32 to vector<8x128xf32>
    %157 = arith.subf %156, %150 : vector<8x128xf32>
    %158 = arith.mulf %157, %145 : vector<8x128xf32>
    %159 = arith.mulf %150, %13 : vector<8x128xf32>
    %160 = arith.addf %158, %159 : vector<8x128xf32>
    %161 = arith.addf %160, %136 : vector<8x128xf32>
    %c3_i32 = arith.constant 3 : i32
    %162 = arith.index_cast %c3_i32 : i32 to index
    %c0_53 = arith.constant 0 : index
    %c0_54 = arith.constant 0 : index
    %163 = vector.load %arg2[%162, %c0_53, %c0_54] : memref<4x8x128xbf16, #tpu.memory_space<vmem>>, vector<1x8x128xbf16>
    %164 = vector.shape_cast %163 : vector<1x8x128xbf16> to vector<8x128xbf16>
    %165 = arith.extf %164 : vector<8x128xbf16> to vector<8x128xf32>
    %166 = arith.index_cast %c3_i32 : i32 to index
    %c0_55 = arith.constant 0 : index
    %c0_56 = arith.constant 0 : index
    %167 = vector.load %arg11[%166, %c0_55, %c0_56] : memref<4x8x512xf32, #tpu.memory_space<vmem>>, vector<1x8x512xf32>
    %168 = vector.shape_cast %167 : vector<1x8x512xf32> to vector<8x512xf32>
    %169 = arith.truncf %161 : vector<8x128xf32> to vector<8x128xbf16>
    %cst_57 = arith.constant dense<0.000000e+00> : vector<8x512xf32>
    %170 = tpu.matmul %169, %12, %cst_57 {dimension_numbers = #tpu.dot_dimension_numbers<[1], [0], [0], [1], [0, 0, 1, 1], [], []>} : vector<8x128xbf16>, vector<128x512xbf16>, vector<8x512xf32> -> vector<8x512xf32>
    %171 = arith.addf %168, %170 : vector<8x512xf32>
    %172 = vector.extract_strided_slice %171 {offsets = [0, 0], sizes = [8, 128], strides = [1, 1]} : vector<8x512xf32> to vector<8x128xf32>
    %173 = arith.negf %172 : vector<8x128xf32>
    %174 = math.exp %173 : vector<8x128xf32>
    %cst_58 = arith.constant 1.000000e+00 : f32
    %175 = vector.broadcast %cst_58 : f32 to vector<8x128xf32>
    %176 = arith.addf %175, %174 : vector<8x128xf32>
    %177 = arith.divf %175, %176 : vector<8x128xf32>
    %178 = vector.extract_strided_slice %171 {offsets = [0, 128], sizes = [8, 128], strides = [1, 1]} : vector<8x512xf32> to vector<8x128xf32>
    %179 = arith.negf %178 : vector<8x128xf32>
    %180 = math.exp %179 : vector<8x128xf32>
    %cst_59 = arith.constant 1.000000e+00 : f32
    %181 = vector.broadcast %cst_59 : f32 to vector<8x128xf32>
    %182 = arith.addf %181, %180 : vector<8x128xf32>
    %183 = arith.divf %181, %182 : vector<8x128xf32>
    %184 = vector.extract_strided_slice %171 {offsets = [0, 256], sizes = [8, 128], strides = [1, 1]} : vector<8x512xf32> to vector<8x128xf32>
    %185 = math.tanh %184 : vector<8x128xf32>
    %186 = vector.extract_strided_slice %171 {offsets = [0, 384], sizes = [8, 128], strides = [1, 1]} : vector<8x512xf32> to vector<8x128xf32>
    %187 = arith.negf %186 : vector<8x128xf32>
    %188 = math.exp %187 : vector<8x128xf32>
    %cst_60 = arith.constant 1.000000e+00 : f32
    %189 = vector.broadcast %cst_60 : f32 to vector<8x128xf32>
    %190 = arith.addf %189, %188 : vector<8x128xf32>
    %191 = arith.divf %189, %190 : vector<8x128xf32>
    %192 = arith.mulf %177, %161 : vector<8x128xf32>
    %193 = arith.mulf %183, %165 : vector<8x128xf32>
    %194 = arith.addf %192, %193 : vector<8x128xf32>
    %195 = arith.subf %194, %191 : vector<8x128xf32>
    %cst_61 = arith.constant 0.000000e+00 : f32
    %196 = vector.broadcast %cst_61 : f32 to vector<8x128xf32>
    %197 = arith.cmpf oge, %195, %196 : vector<8x128xf32>
    %198 = arith.extui %197 : vector<8x128xi1> to vector<8x128xi32>
    %199 = arith.sitofp %198 : vector<8x128xi32> to vector<8x128xf32>
    %200 = arith.truncf %199 : vector<8x128xf32> to vector<8x128xbf16>
    %201 = arith.index_cast %c3_i32 : i32 to index
    %c0_62 = arith.constant 0 : index
    %c0_63 = arith.constant 0 : index
    %202 = vector.load %arg8[%201, %c0_62, %c0_63] : memref<4x8x128xbf16, #tpu.memory_space<vmem>>, vector<1x8x128xbf16>
    %203 = vector.shape_cast %202 : vector<1x8x128xbf16> to vector<8x128xbf16>
    %204 = vector.shape_cast %200 : vector<8x128xbf16> to vector<1x8x128xbf16>
    tpu.vector_store %arg8[%201, %c0_62, %c0_63], %204 {strides = array<i32>} : memref<4x8x128xbf16, #tpu.memory_space<vmem>>, vector<1x8x128xbf16>,
    %cst_64 = arith.constant 1.000000e+00 : f32
    %205 = vector.broadcast %cst_64 : f32 to vector<8x128xf32>
    %206 = arith.subf %205, %199 : vector<8x128xf32>
    %207 = arith.mulf %206, %194 : vector<8x128xf32>
    %208 = arith.mulf %199, %13 : vector<8x128xf32>
    %209 = arith.addf %207, %208 : vector<8x128xf32>
    %210 = arith.addf %209, %185 : vector<8x128xf32>
    %c4_i32 = arith.constant 4 : i32
    %c0_65 = arith.constant 0 : index
    %c0_66 = arith.constant 0 : index
    %211 = vector.load %arg10[%c0_65, %c0_66] : memref<8x128xf32, #tpu.memory_space<vmem>>, vector<8x128xf32>
    tpu.vector_store %arg10[%c0_65, %c0_66], %210 {strides = array<i32>} : memref<8x128xf32, #tpu.memory_space<vmem>>, vector<8x128xf32>,
    %c1_i32_67 = arith.constant 1 : i32
    %212 = arith.cmpi eq, %arg1, %c1_i32_67 : i32
    %213 = arith.extui %212 : i1 to i32
    %c0_i32_68 = arith.constant 0 : i32
    %214 = arith.cmpi ne, %213, %c0_i32_68 : i32
    scf.if %214 {
      %c0_69 = arith.constant 0 : index
      %c0_70 = arith.constant 0 : index
      %215 = vector.load %arg9[%c0_69, %c0_70] : memref<8x128xf32, #tpu.memory_space<vmem>>, vector<8x128xf32>
      tpu.vector_store %arg9[%c0_69, %c0_70], %210 {strides = array<i32>} : memref<8x128xf32, #tpu.memory_space<vmem>>, vector<8x128xf32>,
    } else {
    }
    return
  }
  func.func @transform_0(%arg0: i32, %arg1: i32) -> (i32, i32, i32) {
    %c0_i32 = arith.constant 0 : i32
    %c0_i32_0 = arith.constant 0 : i32
    return %arg1, %arg0, %c0_i32 : i32, i32, i32
  }
  func.func @transform_1(%arg0: i32, %arg1: i32) -> (i32, i32) {
    %c0_i32 = arith.constant 0 : i32
    %c0_i32_0 = arith.constant 0 : i32
    return %arg0, %c0_i32 : i32, i32
  }
  func.func @transform_2(%arg0: i32, %arg1: i32) -> (i32, i32) {
    %c0_i32 = arith.constant 0 : i32
    %c0_i32_0 = arith.constant 0 : i32
    return %arg0, %c0_i32 : i32, i32
  }
  func.func @transform_3(%arg0: i32, %arg1: i32) -> (i32, i32) {
    %c0_i32 = arith.constant 0 : i32
    %c0_i32_0 = arith.constant 0 : i32
    %c0_i32_1 = arith.constant 0 : i32
    return %c0_i32, %c0_i32_0 : i32, i32
  }
  func.func @transform_4(%arg0: i32, %arg1: i32) -> (i32, i32) {
    %c0_i32 = arith.constant 0 : i32
    %c0_i32_0 = arith.constant 0 : i32
    %c0_i32_1 = arith.constant 0 : i32
    return %c0_i32, %c0_i32_0 : i32, i32
  }
  func.func @transform_5(%arg0: i32, %arg1: i32) -> (i32, i32) {
    %c0_i32 = arith.constant 0 : i32
    %c0_i32_0 = arith.constant 0 : i32
    %c0_i32_1 = arith.constant 0 : i32
    return %c0_i32, %c0_i32_0 : i32, i32
  }
  func.func @transform_6(%arg0: i32, %arg1: i32) -> (i32, i32, i32) {
    %c0_i32 = arith.constant 0 : i32
    %c0_i32_0 = arith.constant 0 : i32
    return %arg1, %arg0, %c0_i32 : i32, i32, i32
  }
  func.func @transform_7(%arg0: i32, %arg1: i32) -> (i32, i32) {
    %c0_i32 = arith.constant 0 : i32
    %c0_i32_0 = arith.constant 0 : i32
    return %arg0, %c0_i32 : i32, i32
  }
}

</mosaic_0001>

<llo_original>
// kernel: gpn_forward.1
$region0: #{gpn_forward.1}
  #allocation0 [shape = 'u32[]', space=smem, size = 0x4, offset = 0x4, fixed_abs, tag = 'smem constant byte address 0x4 - core index']
  #allocation1 [shape = 'u32[144,128]{1,0:T(1,128)}', space=vmem, size = 0x12000, scoped, tag = 'internal scratch']
  #allocation2 [shape = 'f32[8,128]{1,0:T(8,128)}', space=vmem, size = 0x1000, scoped, tag = 'scratch operand']
  #allocation3 [shape = 'f32[4,8,512]{2,1,0:T(8,128)}', space=vmem, size = 0x10000, scoped, tag = 'scratch operand']
  %s0 = inlined_call_operand.vmem [shape: bf16[8,16,128], index: 0, kind: input, shape index: {}]
  %s1 = inlined_call_operand.vmem [shape: f32[16,128], index: 1, kind: input, shape index: {}]
  %s2 = inlined_call_operand.vmem [shape: f32[16,128], index: 2, kind: input, shape index: {}]
  %s3 = inlined_call_operand.vmem [shape: bf16[128,512], index: 3, kind: input, shape index: {}]
  %s4 = inlined_call_operand.vmem [shape: bf16[128,512], index: 4, kind: input, shape index: {}]
  %s5 = inlined_call_operand.vmem [shape: f32[1,512], index: 5, kind: input, shape index: {}]
  %s6 = inlined_call_operand.hbm [shape: bf16[8,16,128], index: 6, kind: output, shape index: {0}]
  %s7 = inlined_call_operand.hbm [shape: f32[16,128], index: 7, kind: output, shape index: {1}]
  %8 = xla_tuple %s6, %s7
  %s9 = sld [smem:[#allocation0]]
  $region114: #{gpn_forward.1} parent=0
    _
  %s11 = ssub.s32 1, %s9
  %s12 = scalar_select 0, %s11, %s9
  $region1: #{gpn_forward.1} parent=0
    #allocation4 [shape = 'u8[16384]{0}', space=vmem, size = 0x4000, scoped, tag = 'input window, operand 0']
    #allocation5 [shape = 'u8[16384]{0}', space=vmem, size = 0x4000, scoped, tag = 'output window, operand 0']
    #allocation6 [shape = 's32[2]{0}', space=sflag, size = 0x8, scoped, tag = 'scoped memory for gpn_forward.1']
    #allocation7 [shape = 'u8[8192]{0}', space=vmem, size = 0x2000, scoped, tag = 'output window, operand 1']
    #allocation8 [shape = 's32[2]{0}', space=sflag, size = 0x8, scoped, tag = 'scoped memory for gpn_forward.1']
    %13 = vsyncpa [#allocation6], 0
    %s14 = scalar_lea.sflag [#allocation6], 1
    %15 = vsyncpa %s14, 0
    %16 = vsyncpa [#allocation8], 0
    %s17 = scalar_lea.sflag [#allocation8], 1
    %18 = vsyncpa %s17, 0
    loop: start=0, step=1, limit=6
    $region2: #{gpn_forward.1} parent=1 // loop_pre_header
      _
    $region3: #{gpn_forward.1} parent=1 // loop_header
      %s20 = sphi 0, %s24
      %p21 = scmp.ge.s32.totalorder %s20, 6
      %s27 = sphi 0, %s39
      %s28 = sphi 0, %s35
      %s29 = sphi 0, %s27
      %s30 = sphi 0, %s28
      %s31 = sphi 0, %s29
      %s32 = sphi 0, %s30
      %s44 = sphi 0, %s46
      %s47 = sphi 0, %s44
      %s48 = sphi 0, %s47
      %s64 = sphi 0, %s48
      %s70 = sphi 0, %s72
      %s73 = sphi 0, %s70
      %s74 = sphi 0, %s73
      %s90 = sphi 0, %s74
      %s96 = sphi 0, %s98
      %s99 = sphi 0, %s96
      %s100 = sphi 0, %s99
      %s116 = sphi 0, %s100
      %s120 = sphi 0, %s120
      %s122 = sphi 0, %s120
      %s123 = sphi 0, %s122
      %s137 = sphi 0, %s123
      %s141 = sphi 0, %s141
      %s143 = sphi 0, %s141
      %s144 = sphi 0, %s143
      %s158 = sphi 0, %s144
      %s162 = sphi 0, %s162
      %s164 = sphi 0, %s162
      %s165 = sphi 0, %s164
      %s179 = sphi 0, %s165
      %s187 = sphi 0, %s189
      %s190 = sphi 0, %s187
      %s191 = sphi 0, %s190
      %s207 = sphi 0, %s191
      %s213 = sphi 0, %s215
      %s216 = sphi 0, %s213
      %s217 = sphi 0, %s216
      %s233 = sphi 0, %s217
    $region4: #{gpn_forward.1} parent=1 // loop_header_branch
      %23 = sbr.rel (%p21) target = $region8
    $region5: #{gpn_forward.1} parent=1 // loop_body
      %s25 = ssub.s32 %s20, 1
      %s26 = ssub.s32 %s20, 2
      %s33 = sadd.s32 1, %s28
      %p34 = scmp.ge.s32.totalorder %s33, 2
      %s35 = scalar_select %p34, 0, %s33
      %s36 = sadd.s32 1, %s27
      %s37 = scalar_select %p34, %s36, %s27
      %p38 = scmp.ge.s32.totalorder %s37, 2
      %s39 = scalar_select %p38, 0, %s37
      %s40 = ssub.s32 %s28, %s35
      %s41 = ssub.s32 %s27, %s39
      %s42 = sor.u32 %s40, %s41
      %p43 = scmp.eq.s32.totalorder %s42, 0
      %s45 = sadd.s32 %s44, 1
      %s46 = scalar_select %p43, %s44, %s45
      %p49 = pneg %p43
      %p50 = scmp.eq.s32.totalorder %s20, 3
      %p51 = por %p49, %p50
      %p52 = scmp.ne.s32.totalorder %s44, %s47
      %p53 = scmp.eq.s32.totalorder %s20, 0
      %p54 = por %p52, %p53
      %p55 = scmp.ne.s32.totalorder %s44, %s47
      %p56 = scmp.eq.s32.totalorder %s25, 3
      %p57 = por %p55, %p56
      %p58 = scmp.ne.s32.totalorder %s47, %s48
      %p59 = scmp.eq.s32.totalorder %s25, 0
      %p60 = por %p58, %p59
      %p61 = scmp.ne.s32.totalorder %s47, %s48
      %p62 = scmp.eq.s32.totalorder %s26, 3
      %p63 = por %p61, %p62
      %p65 = scmp.ne.s32.totalorder %s48, %s64
      %p66 = scmp.eq.s32.totalorder %s26, 0
      %p67 = por %p65, %p66
      %s68 = ssub.s32 %s27, %s39
      %p69 = scmp.eq.s32.totalorder %s68, 0
      %s71 = sadd.s32 %s70, 1
      %s72 = scalar_select %p69, %s70, %s71
      %p75 = pneg %p69
      %p76 = scmp.eq.s32.totalorder %s20, 3
      %p77 = por %p75, %p76
      %p78 = scmp.ne.s32.totalorder %s70, %s73
      %p79 = scmp.eq.s32.totalorder %s20, 0
      %p80 = por %p78, %p79
      %p81 = scmp.ne.s32.totalorder %s70, %s73
      %p82 = scmp.eq.s32.totalorder %s25, 3
      %p83 = por %p81, %p82
      %p84 = scmp.ne.s32.totalorder %s73, %s74
      %p85 = scmp.eq.s32.totalorder %s25, 0
      %p86 = por %p84, %p85
      %p87 = scmp.ne.s32.totalorder %s73, %s74
      %p88 = scmp.eq.s32.totalorder %s26, 3
      %p89 = por %p87, %p88
      %p91 = scmp.ne.s32.totalorder %s74, %s90
      %p92 = scmp.eq.s32.totalorder %s26, 0
      %p93 = por %p91, %p92
      %s94 = ssub.s32 %s27, %s39
      %p95 = scmp.eq.s32.totalorder %s94, 0
      %s97 = sadd.s32 %s96, 1
      %s98 = scalar_select %p95, %s96, %s97
      %p101 = pneg %p95
      %p102 = scmp.eq.s32.totalorder %s20, 3
      %p103 = por %p101, %p102
      %p104 = scmp.ne.s32.totalorder %s96, %s99
      %p105 = scmp.eq.s32.totalorder %s20, 0
      %p106 = por %p104, %p105
      %p107 = scmp.ne.s32.totalorder %s96, %s99
      %p108 = scmp.eq.s32.totalorder %s25, 3
      %p109 = por %p107, %p108
      %p110 = scmp.ne.s32.totalorder %s99, %s100
      %p111 = scmp.eq.s32.totalorder %s25, 0
      %p112 = por %p110, %p111
      %p113 = scmp.ne.s32.totalorder %s99, %s100
      %p114 = scmp.eq.s32.totalorder %s26, 3
      %p115 = por %p113, %p114
      %p117 = scmp.ne.s32.totalorder %s100, %s116
      %p118 = scmp.eq.s32.totalorder %s26, 0
      %p119 = por %p117, %p118
      %s121 = sadd.s32 %s120, 1
      %p124 = scmp.eq.s32.totalorder %s20, 3
      %p125 = scmp.ne.s32.totalorder %s120, %s122
      %p126 = scmp.eq.s32.totalorder %s20, 0
      %p127 = por %p125, %p126
      %p128 = scmp.ne.s32.totalorder %s120, %s122
      %p129 = scmp.eq.s32.totalorder %s25, 3
      %p130 = por %p128, %p129
      %p131 = scmp.ne.s32.totalorder %s122, %s123
      %p132 = scmp.eq.s32.totalorder %s25, 0
      %p133 = por %p131, %p132
      %p134 = scmp.ne.s32.totalorder %s122, %s123
      %p135 = scmp.eq.s32.totalorder %s26, 3
      %p136 = por %p134, %p135
      %p138 = scmp.ne.s32.totalorder %s123, %s137
      %p139 = scmp.eq.s32.totalorder %s26, 0
      %p140 = por %p138, %p139
      %s142 = sadd.s32 %s141, 1
      %p145 = scmp.eq.s32.totalorder %s20, 3
      %p146 = scmp.ne.s32.totalorder %s141, %s143
      %p147 = scmp.eq.s32.totalorder %s20, 0
      %p148 = por %p146, %p147
      %p149 = scmp.ne.s32.totalorder %s141, %s143
      %p150 = scmp.eq.s32.totalorder %s25, 3
      %p151 = por %p149, %p150
      %p152 = scmp.ne.s32.totalorder %s143, %s144
      %p153 = scmp.eq.s32.totalorder %s25, 0
      %p154 = por %p152, %p153
      %p155 = scmp.ne.s32.totalorder %s143, %s144
      %p156 = scmp.eq.s32.totalorder %s26, 3
      %p157 = por %p155, %p156
      %p159 = scmp.ne.s32.totalorder %s144, %s158
      %p160 = scmp.eq.s32.totalorder %s26, 0
      %p161 = por %p159, %p160
      %s163 = sadd.s32 %s162, 1
      %p166 = scmp.eq.s32.totalorder %s20, 3
      %p167 = scmp.ne.s32.totalorder %s162, %s164
      %p168 = scmp.eq.s32.totalorder %s20, 0
      %p169 = por %p167, %p168
      %p170 = scmp.ne.s32.totalorder %s162, %s164
      %p171 = scmp.eq.s32.totalorder %s25, 3
      %p172 = por %p170, %p171
      %p173 = scmp.ne.s32.totalorder %s164, %s165
      %p174 = scmp.eq.s32.totalorder %s25, 0
      %p175 = por %p173, %p174
      %p176 = scmp.ne.s32.totalorder %s164, %s165
      %p177 = scmp.eq.s32.totalorder %s26, 3
      %p178 = por %p176, %p177
      %p180 = scmp.ne.s32.totalorder %s165, %s179
      %p181 = scmp.eq.s32.totalorder %s26, 0
      %p182 = por %p180, %p181
      %s183 = ssub.s32 %s28, %s35
      %s184 = ssub.s32 %s27, %s39
      %s185 = sor.u32 %s183, %s184
      %p186 = scmp.eq.s32.totalorder %s185, 0
      %s188 = sadd.s32 %s187, 1
      %s189 = scalar_select %p186, %s187, %s188
      %p192 = pneg %p186
      %p193 = scmp.eq.s32.totalorder %s20, 3
      %p194 = por %p192, %p193
      %p195 = scmp.ne.s32.totalorder %s187, %s190
      %p196 = scmp.eq.s32.totalorder %s20, 0
      %p197 = por %p195, %p196
      %p198 = scmp.ne.s32.totalorder %s187, %s190
      %p199 = scmp.eq.s32.totalorder %s25, 3
      %p200 = por %p198, %p199
      %p201 = scmp.ne.s32.totalorder %s190, %s191
      %p202 = scmp.eq.s32.totalorder %s25, 0
      %p203 = por %p201, %p202
      %p204 = scmp.ne.s32.totalorder %s190, %s191
      %p205 = scmp.eq.s32.totalorder %s26, 3
      %p206 = por %p204, %p205
      %p208 = scmp.ne.s32.totalorder %s191, %s207
      %p209 = scmp.eq.s32.totalorder %s26, 0
      %p210 = por %p208, %p209
      %s211 = ssub.s32 %s27, %s39
      %p212 = scmp.eq.s32.totalorder %s211, 0
      %s214 = sadd.s32 %s213, 1
      %s215 = scalar_select %p212, %s213, %s214
      %p218 = pneg %p212
      %p219 = scmp.eq.s32.totalorder %s20, 3
      %p220 = por %p218, %p219
      %p221 = scmp.ne.s32.totalorder %s213, %s216
      %p222 = scmp.eq.s32.totalorder %s20, 0
      %p223 = por %p221, %p222
      %p224 = scmp.ne.s32.totalorder %s213, %s216
      %p225 = scmp.eq.s32.totalorder %s25, 3
      %p226 = por %p224, %p225
      %p227 = scmp.ne.s32.totalorder %s216, %s217
      %p228 = scmp.eq.s32.totalorder %s25, 0
      %p229 = por %p227, %p228
      %p230 = scmp.ne.s32.totalorder %s216, %s217
      %p231 = scmp.eq.s32.totalorder %s26, 3
      %p232 = por %p230, %p231
      %p234 = scmp.ne.s32.totalorder %s217, %s233
      %p235 = scmp.eq.s32.totalorder %s26, 0
      %p236 = por %p234, %p235
      %p237 = scmp.le.s32.totalorder 1, %s20
      %p238 = scmp.lt.s32.totalorder %s20, 5
      %p239 = pnand %p237, %p238
      %p240 = pneg %p239
      // Predicated region
      $region9: #{gpn_forward.1} parent=5 // pred_check
        _
      $region10: #{gpn_forward.1} parent=5 // pred_check_branch
        %242 = sbr.rel (%p239) target = $region12
      $region11: #{gpn_forward.1} parent=5 // pred_region
        %s243 = ssub.s32 %s20, 1
        // Predicated region
        $region13: #{gpn_forward.1} parent=11 // pred_check
          %p244 = pneg %p133
        $region14: #{gpn_forward.1} parent=11 // pred_check_branch
          %246 = sbr.rel (%p244) target = $region16
        $region15: #{gpn_forward.1} parent=11 // pred_region
          _
        $region16: #{gpn_forward.1} parent=11 // pred_fallthru
          _
        // Predicated region
        $region17: #{gpn_forward.1} parent=11 // pred_check
          %p247 = pneg %p154
        $region18: #{gpn_forward.1} parent=11 // pred_check_branch
          %249 = sbr.rel (%p247) target = $region20
        $region19: #{gpn_forward.1} parent=11 // pred_region
          _
        $region20: #{gpn_forward.1} parent=11 // pred_fallthru
          _
        // Predicated region
        $region21: #{gpn_forward.1} parent=11 // pred_check
          %p250 = pneg %p175
        $region22: #{gpn_forward.1} parent=11 // pred_check_branch
          %252 = sbr.rel (%p250) target = $region24
        $region23: #{gpn_forward.1} parent=11 // pred_region
          _
        $region24: #{gpn_forward.1} parent=11 // pred_fallthru
          _
      $region12: #{gpn_forward.1} parent=5 // pred_fallthru
        _
      %p253 = scmp.lt.s32.totalorder %s20, 4
      // Predicated region
      $region25: #{gpn_forward.1} parent=5 // pred_check
        %p254 = pneg %p253
      $region26: #{gpn_forward.1} parent=5 // pred_check_branch
        %256 = sbr.rel (%p254) target = $region28
      $region27: #{gpn_forward.1} parent=5 // pred_region
        // Predicated region
        $region29: #{gpn_forward.1} parent=27 // pred_check
          %p257 = pneg %p54
        $region30: #{gpn_forward.1} parent=27 // pred_check_branch
          %259 = sbr.rel (%p257) target = $region32
        $region31: #{gpn_forward.1} parent=27 // pred_region
          %s260 = sand.u32 %s44, 1
          %s261 = sand.u32 %s44, 1
          %s262 = smul.addr %s261, 16
          %s263 = scalar_lea.vmem [#allocation4], %s262
          %s264 = smul.u32 4, %s28
          %s265 = smul.addr %s264, 2
          %s266 = sadd.s32 %s27, %s265
          %s267 = smul.addr %s266, 4
          %s268 = scalar_lea.vmem %s0, %s267
          // Predicated region
          $region33: #{gpn_forward.1} parent=31 // pred_check
            _
          $region34: #{gpn_forward.1} parent=31 // pred_check_branch
            %270 = sbr.rel (0) target = $region36
          $region35: #{gpn_forward.1} parent=31 // pred_region
            // Predicated region
            $region37: #{gpn_forward.1} parent=35 // pred_check
              _
            $region38: #{gpn_forward.1} parent=35 // pred_check_branch
              %272 = sbr.rel target = $region40
            $region39: #{gpn_forward.1} parent=35 // pred_region
              // Predicated region
              $region52: #{gpn_forward.1} parent=39 // pred_check
                _
              $region53: #{gpn_forward.1} parent=39 // pred_check_branch
                %294 = sbr.rel (0) target = $region55
              $region54: #{gpn_forward.1} parent=39 // pred_region
                loop: start=0, step=1, limit=1
                $region56: #{gpn_forward.1} parent=54 // loop_pre_header
                  _
                $region57: #{gpn_forward.1} parent=54 // loop_header
                  %s296 = sphi 0, %s300
                  %p297 = scmp.ge.s32.totalorder %s296, 1
                  %s301 = sphi %s268, %s268
                  %s302 = sphi %s263, %s263
                $region58: #{gpn_forward.1} parent=54 // loop_header_branch
                  %299 = sbr.rel (%p297) target = $region62
                $region59: #{gpn_forward.1} parent=54 // loop_body
                  _
                $region60: #{gpn_forward.1} parent=54 // loop_footer
                  %s300 = sadd.s32 1, %s296
                $region61: #{gpn_forward.1} parent=54 // loop_footer_branch
                  %295 = sbr.rel target = $region57
                $region62: #{gpn_forward.1} parent=54 // loop_exit
                  _
                %s304 = ssub.s32 16, 1
                loop: start=0, step=1, limit=1
                $region63: #{gpn_forward.1} parent=54 // loop_pre_header
                  _
                $region64: #{gpn_forward.1} parent=54 // loop_header
                  %s306 = sphi 0, %s310
                  %p307 = scmp.ge.s32.totalorder %s306, 1
                  %s311 = sphi %s268, %s268
                  %s312 = sphi %s263, %s263
                $region65: #{gpn_forward.1} parent=54 // loop_header_branch
                  %309 = sbr.rel (%p307) target = $region69
                $region66: #{gpn_forward.1} parent=54 // loop_body
                  %v313 = vld [vmem:[%s311] sm:%s304]
                  %314 = vst [vmem:[%s312] sm:%s304] %v313
                  %v315 = vld [vmem:[%s311 + $0x8] sm:%s304]
                  %316 = vst [vmem:[%s312 + $0x4] sm:%s304] %v315
                  %v317 = vld [vmem:[%s311 + $0x10] sm:%s304]
                  %318 = vst [vmem:[%s312 + $0x8] sm:%s304] %v317
                  %v319 = vld [vmem:[%s311 + $0x18] sm:%s304]
                  %320 = vst [vmem:[%s312 + $0xc] sm:%s304] %v319
                $region67: #{gpn_forward.1} parent=54 // loop_footer
                  %s310 = sadd.s32 1, %s306
                $region68: #{gpn_forward.1} parent=54 // loop_footer_branch
                  %305 = sbr.rel target = $region64
                $region69: #{gpn_forward.1} parent=54 // loop_exit
                  _
              $region55: #{gpn_forward.1} parent=39 // pred_fallthru
                _
            $region40: #{gpn_forward.1} parent=35 // pred_fallthru
              _
            // Predicated region
            $region41: #{gpn_forward.1} parent=35 // pred_check
              _
            $region42: #{gpn_forward.1} parent=35 // pred_check_branch
              %274 = sbr.rel (0) target = $region44
            $region43: #{gpn_forward.1} parent=35 // pred_region
              %s276 = ssub.s32 16, 1
              loop: start=0, step=1, limit=1
              $region45: #{gpn_forward.1} parent=43 // loop_pre_header
                _
              $region46: #{gpn_forward.1} parent=43 // loop_header
                %s278 = sphi 0, %s282
                %p279 = scmp.ge.s32.totalorder %s278, 1
                %s283 = sphi %s268, %s268
                %s284 = sphi %s263, %s263
              $region47: #{gpn_forward.1} parent=43 // loop_header_branch
                %281 = sbr.rel (%p279) target = $region51
              $region48: #{gpn_forward.1} parent=43 // loop_body
                %v285 = vld [vmem:[%s283] sm:%s276]
                %286 = vst [vmem:[%s284] sm:%s276] %v285
                %v287 = vld [vmem:[%s283 + $0x8] sm:%s276]
                %288 = vst [vmem:[%s284 + $0x4] sm:%s276] %v287
                %v289 = vld [vmem:[%s283 + $0x10] sm:%s276]
                %290 = vst [vmem:[%s284 + $0x8] sm:%s276] %v289
                %v291 = vld [vmem:[%s283 + $0x18] sm:%s276]
                %292 = vst [vmem:[%s284 + $0xc] sm:%s276] %v291
              $region49: #{gpn_forward.1} parent=43 // loop_footer
                %s282 = sadd.s32 1, %s278
              $region50: #{gpn_forward.1} parent=43 // loop_footer_branch
                %277 = sbr.rel target = $region46
              $region51: #{gpn_forward.1} parent=43 // loop_exit
                _
            $region44: #{gpn_forward.1} parent=35 // pred_fallthru
              _
          $region36: #{gpn_forward.1} parent=31 // pred_fallthru
            _
          %321 = vnop
        $region32: #{gpn_forward.1} parent=27 // pred_fallthru
          _
        // Predicated region
        $region70: #{gpn_forward.1} parent=27 // pred_check
          %p322 = pneg %p80
        $region71: #{gpn_forward.1} parent=27 // pred_check_branch
          %324 = sbr.rel (%p322) target = $region73
        $region72: #{gpn_forward.1} parent=27 // pred_region
          %p325 = scmp.lt.s32.totalorder %s27, 1
          %s326 = scalar_select %p325, %s27, 1
          %s327 = smul.addr %s326, 8
          %s328 = scalar_lea.vmem %s1, %s327
        $region73: #{gpn_forward.1} parent=27 // pred_fallthru
          _
        // Predicated region
        $region74: #{gpn_forward.1} parent=27 // pred_check
          %p329 = pneg %p106
        $region75: #{gpn_forward.1} parent=27 // pred_check_branch
          %331 = sbr.rel (%p329) target = $region77
        $region76: #{gpn_forward.1} parent=27 // pred_region
          %p332 = scmp.lt.s32.totalorder %s27, 1
          %s333 = scalar_select %p332, %s27, 1
          %s334 = smul.addr %s333, 8
          %s335 = scalar_lea.vmem %s2, %s334
        $region77: #{gpn_forward.1} parent=27 // pred_fallthru
          _
      $region28: #{gpn_forward.1} parent=5 // pred_fallthru
        _
      %p336 = scmp.le.s32.totalorder 1, %s20
      %p337 = scmp.lt.s32.totalorder %s20, 5
      %p338 = pnand %p336, %p337
      %p339 = pneg %p338
      // Predicated region
      $region78: #{gpn_forward.1} parent=5 // pred_check
        _
      $region79: #{gpn_forward.1} parent=5 // pred_check_branch
        %341 = sbr.rel (%p338) target = $region81
      $region80: #{gpn_forward.1} parent=5 // pred_region
        %s342 = ssub.s32 %s20, 1
        %s343 = sand.u32 %s47, 1
        %s344 = sand.u32 %s47, 1
        %s345 = smul.addr %s344, 16
        %s346 = scalar_lea.vmem [#allocation4], %s345
        // Predicated region
        $region82: #{gpn_forward.1} parent=80 // pred_check
          %p347 = pneg %p60
        $region83: #{gpn_forward.1} parent=80 // pred_check_branch
          %349 = sbr.rel (%p347) target = $region85
        $region84: #{gpn_forward.1} parent=80 // pred_region
          _
        $region85: #{gpn_forward.1} parent=80 // pred_fallthru
          _
        %s350 = sand.u32 %s47, 1
        %s351 = sand.u32 %s47, 1
        %s352 = smul.addr %s351, 16
        %s353 = scalar_lea.vmem [#allocation4], %s352
        %p354 = pneg %p60
        %p355 = pneg %p57
        %p356 = scmp.lt.s32.totalorder %s29, 1
        %s357 = scalar_select %p356, %s29, 1
        %s358 = smul.addr %s357, 8
        %s359 = scalar_lea.vmem %s1, %s358
        %p360 = pneg %p86
        %p361 = pneg %p83
        %p362 = scmp.lt.s32.totalorder %s29, 1
        %s363 = scalar_select %p362, %s29, 1
        %s364 = smul.addr %s363, 8
        %s365 = scalar_lea.vmem %s2, %s364
        %p366 = pneg %p112
        %p367 = pneg %p109
        %p368 = pneg %p133
        %p369 = pneg %p130
        %p370 = pneg %p154
        %p371 = pneg %p151
        %p372 = pneg %p175
        %p373 = pneg %p172
        %p374 = pneg %p203
        %p375 = pneg %p200
        %s376 = sand.u32 %s190, 1
        %s377 = scalar_lea.sflag [#allocation6], %s376
        %s378 = sand.u32 %s190, 1
        %s379 = smul.addr %s378, 16
        %s380 = scalar_lea.vmem [#allocation5], %s379
        %p381 = pneg %p229
        %p382 = pneg %p226
        %s383 = sand.u32 %s216, 1
        %s384 = scalar_lea.sflag [#allocation8], %s383
        %s385 = sand.u32 %s216, 1
        %s386 = smul.addr %s385, 8
        %s387 = scalar_lea.vmem [#allocation7], %s386
        %s388 = smul.u32 4, %s30
        %p389 = scmp.lt.s32.totalorder %s29, 1
        %s390 = scalar_select %p389, %s29, 1
        %s391 = smul.addr %s390, 8
        %s392 = scalar_lea.vmem %s1, %s391
        %p393 = scmp.lt.s32.totalorder %s29, 1
        %s394 = scalar_select %p393, %s29, 1
        %s395 = smul.addr %s394, 8
        %s396 = scalar_lea.vmem %s2, %s395
        %s397 = smul.u32 4, %s30
        %p399 = scmp.eq.s32.totalorder %s30, 0
        // Predicated region
        $region86: #{gpn_forward.1} parent=80 // pred_check
          %p400 = pneg %p399
        $region87: #{gpn_forward.1} parent=80 // pred_check_branch
          %402 = sbr.rel (%p400) target = $region89
        $region88: #{gpn_forward.1} parent=80 // pred_region
          %v403 = vld [vmem:[%s392] sm:$0xff]
          %404 = vst [vmem:[#allocation2] sm:$0xff] %v403
        $region89: #{gpn_forward.1} parent=80 // pred_fallthru
          _
        %v405 = vld [vmem:[%s346] sm:$0xf]
        %v406 = vld [vmem:[%s346 + $0x4] sm:$0xf]
        %v407 = vld [vmem:[%s346 + $0x8] sm:$0xf]
        %v408 = vld [vmem:[%s346 + $0xc] sm:$0xf]
        %v409 = vld [vmem:[%s4] sm:$0xff]
        %v410 = vld [vmem:[%s4 + $0x8] sm:$0xff]
        %v411 = vld [vmem:[%s4 + $0x10] sm:$0xff]
        %v412 = vld [vmem:[%s4 + $0x18] sm:$0xff]
        %v413 = vld [vmem:[%s4 + $0x20] sm:$0xff]
        %v414 = vld [vmem:[%s4 + $0x28] sm:$0xff]
        %v415 = vld [vmem:[%s4 + $0x30] sm:$0xff]
        %v416 = vld [vmem:[%s4 + $0x38] sm:$0xff]
        %v417 = vld [vmem:[%s4 + $0x40] sm:$0xff]
        %v418 = vld [vmem:[%s4 + $0x48] sm:$0xff]
        %v419 = vld [vmem:[%s4 + $0x50] sm:$0xff]
        %v420 = vld [vmem:[%s4 + $0x58] sm:$0xff]
        %v421 = vld [vmem:[%s4 + $0x60] sm:$0xff]
        %v422 = vld [vmem:[%s4 + $0x68] sm:$0xff]
        %v423 = vld [vmem:[%s4 + $0x70] sm:$0xff]
        %v424 = vld [vmem:[%s4 + $0x78] sm:$0xff]
        %v425 = vld [vmem:[%s4 + $0x80] sm:$0xff]
        %v426 = vld [vmem:[%s4 + $0x88] sm:$0xff]
        %v427 = vld [vmem:[%s4 + $0x90] sm:$0xff]
        %v428 = vld [vmem:[%s4 + $0x98] sm:$0xff]
        %v429 = vld [vmem:[%s4 + $0xa0] sm:$0xff]
        %v430 = vld [vmem:[%s4 + $0xa8] sm:$0xff]
        %v431 = vld [vmem:[%s4 + $0xb0] sm:$0xff]
        %v432 = vld [vmem:[%s4 + $0xb8] sm:$0xff]
        %v433 = vld [vmem:[%s4 + $0xc0] sm:$0xff]
        %v434 = vld [vmem:[%s4 + $0xc8] sm:$0xff]
        %v435 = vld [vmem:[%s4 + $0xd0] sm:$0xff]
        %v436 = vld [vmem:[%s4 + $0xd8] sm:$0xff]
        %v437 = vld [vmem:[%s4 + $0xe0] sm:$0xff]
        %v438 = vld [vmem:[%s4 + $0xe8] sm:$0xff]
        %v439 = vld [vmem:[%s4 + $0xf0] sm:$0xff]
        %v440 = vld [vmem:[%s4 + $0xf8] sm:$0xff]
        %v441 = vld [vmem:[%s5] sm:$0xf]
        %v443 = vlaneseq
        %v444 = vshrl.u32 %v443, 7
        %v445 = vsub.s32 0, %v444
        %v446 = vrot.slane %v441, %v445
        %v447 = vlaneseq
        %v448 = vshrl.u32 %v447, 7
        %v449 = vsub.s32 1, %v448
        %v450 = vrot.slane %v441, %v449
        %v451 = vlaneseq
        %v452 = vshrl.u32 %v451, 7
        %v453 = vsub.s32 2, %v452
        %v454 = vrot.slane %v441, %v453
        %v455 = vlaneseq
        %v456 = vshrl.u32 %v455, 7
        %v457 = vsub.s32 3, %v456
        %v458 = vrot.slane %v441, %v457
        %v467 = vunpack.c.l.b16 %v405
        %v468 = vunpack.c.l.b16 %v406
        %v469 = vunpack.c.l.b16 %v407
        %v470 = vunpack.c.l.b16 %v408
        %v471 = vpack.c.b16 %v468, %v467
        %v472 = vpack.c.b16 %v470, %v469
        %v507 = vunpack.c.l.b16 %v409
        %v508 = vunpack.c.h.b16 %v409
        %v509 = vunpack.c.l.b16 %v410
        %v510 = vunpack.c.h.b16 %v410
        %v511 = vunpack.c.l.b16 %v411
        %v512 = vunpack.c.h.b16 %v411
        %v513 = vunpack.c.l.b16 %v412
        %v514 = vunpack.c.h.b16 %v412
        %v515 = vunpack.c.l.b16 %v413
        %v516 = vunpack.c.h.b16 %v413
        %v517 = vunpack.c.l.b16 %v414
        %v518 = vunpack.c.h.b16 %v414
        %v519 = vunpack.c.l.b16 %v415
        %v520 = vunpack.c.h.b16 %v415
        %v521 = vunpack.c.l.b16 %v416
        %v522 = vunpack.c.h.b16 %v416
        %v523 = vunpack.c.l.b16 %v417
        %v524 = vunpack.c.h.b16 %v417
        %v525 = vunpack.c.l.b16 %v418
        %v526 = vunpack.c.h.b16 %v418
        %v527 = vunpack.c.l.b16 %v419
        %v528 = vunpack.c.h.b16 %v419
        %v529 = vunpack.c.l.b16 %v420
        %v530 = vunpack.c.h.b16 %v420
        %v531 = vunpack.c.l.b16 %v421
        %v532 = vunpack.c.h.b16 %v421
        %v533 = vunpack.c.l.b16 %v422
        %v534 = vunpack.c.h.b16 %v422
        %v535 = vunpack.c.l.b16 %v423
        %v536 = vunpack.c.h.b16 %v423
        %v537 = vunpack.c.l.b16 %v424
        %v538 = vunpack.c.h.b16 %v424
        %v539 = vunpack.c.l.b16 %v425
        %v540 = vunpack.c.h.b16 %v425
        %v541 = vunpack.c.l.b16 %v426
        %v542 = vunpack.c.h.b16 %v426
        %v543 = vunpack.c.l.b16 %v427
        %v544 = vunpack.c.h.b16 %v427
        %v545 = vunpack.c.l.b16 %v428
        %v546 = vunpack.c.h.b16 %v428
        %v547 = vunpack.c.l.b16 %v429
        %v548 = vunpack.c.h.b16 %v429
        %v549 = vunpack.c.l.b16 %v430
        %v550 = vunpack.c.h.b16 %v430
        %v551 = vunpack.c.l.b16 %v431
        %v552 = vunpack.c.h.b16 %v431
        %v553 = vunpack.c.l.b16 %v432
        %v554 = vunpack.c.h.b16 %v432
        %v555 = vunpack.c.l.b16 %v433
        %v556 = vunpack.c.h.b16 %v433
        %v557 = vunpack.c.l.b16 %v434
        %v558 = vunpack.c.h.b16 %v434
        %v559 = vunpack.c.l.b16 %v435
        %v560 = vunpack.c.h.b16 %v435
        %v561 = vunpack.c.l.b16 %v436
        %v562 = vunpack.c.h.b16 %v436
        %v563 = vunpack.c.l.b16 %v437
        %v564 = vunpack.c.h.b16 %v437
        %v565 = vunpack.c.l.b16 %v438
        %v566 = vunpack.c.h.b16 %v438
        %v567 = vunpack.c.l.b16 %v439
        %v568 = vunpack.c.h.b16 %v439
        %v569 = vunpack.c.l.b16 %v440
        %v570 = vunpack.c.h.b16 %v440
        %v571 = vpack.c.b16 %v511, %v507
        %v572 = vpack.c.b16 %v512, %v508
        %v573 = vpack.c.b16 %v513, %v509
        %v574 = vpack.c.b16 %v514, %v510
        %v575 = vpack.c.b16 %v519, %v515
        %v576 = vpack.c.b16 %v520, %v516
        %v577 = vpack.c.b16 %v521, %v517
        %v578 = vpack.c.b16 %v522, %v518
        %v579 = vpack.c.b16 %v527, %v523
        %v580 = vpack.c.b16 %v528, %v524
        %v581 = vpack.c.b16 %v529, %v525
        %v582 = vpack.c.b16 %v530, %v526
        %v583 = vpack.c.b16 %v535, %v531
        %v584 = vpack.c.b16 %v536, %v532
        %v585 = vpack.c.b16 %v537, %v533
        %v586 = vpack.c.b16 %v538, %v534
        %v587 = vpack.c.b16 %v543, %v539
        %v588 = vpack.c.b16 %v544, %v540
        %v589 = vpack.c.b16 %v545, %v541
        %v590 = vpack.c.b16 %v546, %v542
        %v591 = vpack.c.b16 %v551, %v547
        %v592 = vpack.c.b16 %v552, %v548
        %v593 = vpack.c.b16 %v553, %v549
        %v594 = vpack.c.b16 %v554, %v550
        %v595 = vpack.c.b16 %v559, %v555
        %v596 = vpack.c.b16 %v560, %v556
        %v597 = vpack.c.b16 %v561, %v557
        %v598 = vpack.c.b16 %v562, %v558
        %v599 = vpack.c.b16 %v567, %v563
        %v600 = vpack.c.b16 %v568, %v564
        %v601 = vpack.c.b16 %v569, %v565
        %v602 = vpack.c.b16 %v570, %v566
        %635 = vmatprep.subr.bf16.mxu0 %v600
        %636 = vmatpush1.bf16.msra.mxu0 %v599
        %637 = vmatprep.subr.bf16.mxu0 %v596
        %638 = vmatpush1.bf16.msra.mxu0 %v595
        %639 = vmatprep.subr.bf16.mxu0 %v592
        %640 = vmatpush1.bf16.msra.mxu0 %v591
        %641 = vmatprep.subr.bf16.mxu0 %v588
        %642 = vmatpush1.bf16.msra.mxu0 %v587
        %643 = vmatprep.subr.bf16.mxu0 %v584
        %644 = vmatpush1.bf16.msra.mxu0 %v583
        %645 = vmatprep.subr.bf16.mxu0 %v580
        %646 = vmatpush1.bf16.msra.mxu0 %v579
        %647 = vmatprep.subr.bf16.mxu0 %v576
        %648 = vmatpush1.bf16.msra.mxu0 %v575
        %649 = vmatprep.subr.bf16.mxu0 %v572
        %650 = vmatpush1.bf16.msra.mxu0 %v571
        %651 = vmatprep.subr.bf16.mxu0 0
        %652 = vmatpush2.bf16.msra.mxu0 0
        %653 = vmatprep.subr.bf16.mxu0 0
        %654 = vmatpush2.bf16.msra.mxu0 0
        %655 = vmatprep.subr.bf16.mxu0 0
        %656 = vmatpush2.bf16.msra.mxu0 0
        %657 = vmatprep.subr.bf16.mxu0 0
        %658 = vmatpush2.bf16.msra.mxu0 0
        %659 = vmatprep.subr.bf16.mxu0 0
        %660 = vmatpush2.bf16.msra.mxu0 0
        %661 = vmatprep.subr.bf16.mxu0 0
        %662 = vmatpush2.bf16.msra.mxu0 0
        %663 = vmatprep.subr.bf16.mxu0 0
        %664 = vmatpush2.bf16.msra.mxu0 0
        %665 = vmatprep.subr.bf16.mxu0 0
        %666 = vmatpush2.bf16.msra.mxu0 0
        %667 = vmatprep.mubr.bf16.mxu0 0
        %668 = vmatmul.mubr.bf16.gmra.mxu0 %v471
        %v669 = vpop.f32.mrf.mxu0
        %v670 = vadd.f32 %v446, %v669
        %v671 = vpop.f32.mrf.mxu0
        %v672 = vadd.f32 %v450, %v671
        %v673 = vpop.f32.mrf.mxu0
        %v674 = vadd.f32 %v446, %v673
        %v675 = vpop.f32.mrf.mxu0
        %v676 = vadd.f32 %v450, %v675
        %677 = vmatprep.mubr.bf16.mxu0 0
        %678 = vmatmul.mubr.bf16.gmra.mxu0 %v472
        %v679 = vpop.f32.mrf.mxu0
        %v680 = vadd.f32 %v446, %v679
        %v681 = vpop.f32.mrf.mxu0
        %v682 = vadd.f32 %v450, %v681
        %v683 = vpop.f32.mrf.mxu0
        %v684 = vadd.f32 %v446, %v683
        %v685 = vpop.f32.mrf.mxu0
        %v686 = vadd.f32 %v450, %v685
        %687 = vdwg.mxu0
        %688 = vmatprep.subr.bf16.mxu0 %v602
        %689 = vmatpush1.bf16.msra.mxu0 %v601
        %690 = vmatprep.subr.bf16.mxu0 %v598
        %691 = vmatpush1.bf16.msra.mxu0 %v597
        %692 = vmatprep.subr.bf16.mxu0 %v594
        %693 = vmatpush1.bf16.msra.mxu0 %v593
        %694 = vmatprep.subr.bf16.mxu0 %v590
        %695 = vmatpush1.bf16.msra.mxu0 %v589
        %696 = vmatprep.subr.bf16.mxu0 %v586
        %697 = vmatpush1.bf16.msra.mxu0 %v585
        %698 = vmatprep.subr.bf16.mxu0 %v582
        %699 = vmatpush1.bf16.msra.mxu0 %v581
        %700 = vmatprep.subr.bf16.mxu0 %v578
        %701 = vmatpush1.bf16.msra.mxu0 %v577
        %702 = vmatprep.subr.bf16.mxu0 %v574
        %703 = vmatpush1.bf16.msra.mxu0 %v573
        %704 = vmatprep.subr.bf16.mxu0 0
        %705 = vmatpush2.bf16.msra.mxu0 0
        %706 = vmatprep.subr.bf16.mxu0 0
        %707 = vmatpush2.bf16.msra.mxu0 0
        %708 = vmatprep.subr.bf16.mxu0 0
        %709 = vmatpush2.bf16.msra.mxu0 0
        %710 = vmatprep.subr.bf16.mxu0 0
        %711 = vmatpush2.bf16.msra.mxu0 0
        %712 = vmatprep.subr.bf16.mxu0 0
        %713 = vmatpush2.bf16.msra.mxu0 0
        %714 = vmatprep.subr.bf16.mxu0 0
        %715 = vmatpush2.bf16.msra.mxu0 0
        %716 = vmatprep.subr.bf16.mxu0 0
        %717 = vmatpush2.bf16.msra.mxu0 0
        %718 = vmatprep.subr.bf16.mxu0 0
        %719 = vmatpush2.bf16.msra.mxu0 0
        %720 = vmatprep.mubr.bf16.mxu0 0
        %721 = vmatmul.mubr.bf16.gmra.mxu0 %v471
        %v722 = vpop.f32.mrf.mxu0
        %v723 = vadd.f32 %v454, %v722
        %v724 = vpop.f32.mrf.mxu0
        %v725 = vadd.f32 %v458, %v724
        %v726 = vpop.f32.mrf.mxu0
        %v727 = vadd.f32 %v454, %v726
        %v728 = vpop.f32.mrf.mxu0
        %v729 = vadd.f32 %v458, %v728
        %730 = vmatprep.mubr.bf16.mxu0 0
        %731 = vmatmul.mubr.bf16.gmra.mxu0 %v472
        %v732 = vpop.f32.mrf.mxu0
        %v733 = vadd.f32 %v454, %v732
        %v734 = vpop.f32.mrf.mxu0
        %v735 = vadd.f32 %v458, %v734
        %v736 = vpop.f32.mrf.mxu0
        %v737 = vadd.f32 %v454, %v736
        %v738 = vpop.f32.mrf.mxu0
        %v739 = vadd.f32 %v458, %v738
        %740 = vdwg.mxu0
        %741 = vst [vmem:[#allocation3] sm:$0xff] %v670
        %742 = vst [vmem:[#allocation3 + $0x8] sm:$0xff] %v672
        %743 = vst [vmem:[#allocation3 + $0x10] sm:$0xff] %v723
        %744 = vst [vmem:[#allocation3 + $0x18] sm:$0xff] %v725
        %745 = vst [vmem:[#allocation3 + $0x20] sm:$0xff] %v674
        %746 = vst [vmem:[#allocation3 + $0x28] sm:$0xff] %v676
        %747 = vst [vmem:[#allocation3 + $0x30] sm:$0xff] %v727
        %748 = vst [vmem:[#allocation3 + $0x38] sm:$0xff] %v729
        %749 = vst [vmem:[#allocation3 + $0x40] sm:$0xff] %v680
        %750 = vst [vmem:[#allocation3 + $0x48] sm:$0xff] %v682
        %751 = vst [vmem:[#allocation3 + $0x50] sm:$0xff] %v733
        %752 = vst [vmem:[#allocation3 + $0x58] sm:$0xff] %v735
        %753 = vst [vmem:[#allocation3 + $0x60] sm:$0xff] %v684
        %754 = vst [vmem:[#allocation3 + $0x68] sm:$0xff] %v686
        %755 = vst [vmem:[#allocation3 + $0x70] sm:$0xff] %v737
        %756 = vst [vmem:[#allocation3 + $0x78] sm:$0xff] %v739
        %v757 = vld [vmem:[%s3] sm:$0xff]
        %v758 = vld [vmem:[%s3 + $0x8] sm:$0xff]
        %v759 = vld [vmem:[%s3 + $0x10] sm:$0xff]
        %v760 = vld [vmem:[%s3 + $0x18] sm:$0xff]
        %v761 = vld [vmem:[%s3 + $0x20] sm:$0xff]
        %v762 = vld [vmem:[%s3 + $0x28] sm:$0xff]
        %v763 = vld [vmem:[%s3 + $0x30] sm:$0xff]
        %v764 = vld [vmem:[%s3 + $0x38] sm:$0xff]
        %v765 = vld [vmem:[%s3 + $0x40] sm:$0xff]
        %v766 = vld [vmem:[%s3 + $0x48] sm:$0xff]
        %v767 = vld [vmem:[%s3 + $0x50] sm:$0xff]
        %v768 = vld [vmem:[%s3 + $0x58] sm:$0xff]
        %v769 = vld [vmem:[%s3 + $0x60] sm:$0xff]
        %v770 = vld [vmem:[%s3 + $0x68] sm:$0xff]
        %v771 = vld [vmem:[%s3 + $0x70] sm:$0xff]
        %v772 = vld [vmem:[%s3 + $0x78] sm:$0xff]
        %v773 = vld [vmem:[%s3 + $0x80] sm:$0xff]
        %v774 = vld [vmem:[%s3 + $0x88] sm:$0xff]
        %v775 = vld [vmem:[%s3 + $0x90] sm:$0xff]
        %v776 = vld [vmem:[%s3 + $0x98] sm:$0xff]
        %v777 = vld [vmem:[%s3 + $0xa0] sm:$0xff]
        %v778 = vld [vmem:[%s3 + $0xa8] sm:$0xff]
        %v779 = vld [vmem:[%s3 + $0xb0] sm:$0xff]
        %v780 = vld [vmem:[%s3 + $0xb8] sm:$0xff]
        %v781 = vld [vmem:[%s3 + $0xc0] sm:$0xff]
        %v782 = vld [vmem:[%s3 + $0xc8] sm:$0xff]
        %v783 = vld [vmem:[%s3 + $0xd0] sm:$0xff]
        %v784 = vld [vmem:[%s3 + $0xd8] sm:$0xff]
        %v785 = vld [vmem:[%s3 + $0xe0] sm:$0xff]
        %v786 = vld [vmem:[%s3 + $0xe8] sm:$0xff]
        %v787 = vld [vmem:[%s3 + $0xf0] sm:$0xff]
        %v788 = vld [vmem:[%s3 + $0xf8] sm:$0xff]
        %v789 = vld [vmem:[%s396] sm:$0xff]
        %v790 = vld [vmem:[#allocation2] sm:$0xff]
        %v791 = vld [vmem:[%s346] sm:$0xf]
        %v792 = vunpack.c.l.bf16 %v791
        %v793 = vld [vmem:[#allocation3] sm:$0xff]
        %v794 = vld [vmem:[#allocation3 + $0x8] sm:$0xff]
        %v795 = vld [vmem:[#allocation3 + $0x10] sm:$0xff]
        %v796 = vld [vmem:[#allocation3 + $0x18] sm:$0xff]
        %v797 = vpack.c.bf16 %v790, %v790
        %v830 = vunpack.c.l.b16 %v757
        %v831 = vunpack.c.h.b16 %v757
        %v832 = vunpack.c.l.b16 %v758
        %v833 = vunpack.c.h.b16 %v758
        %v834 = vunpack.c.l.b16 %v759
        %v835 = vunpack.c.h.b16 %v759
        %v836 = vunpack.c.l.b16 %v760
        %v837 = vunpack.c.h.b16 %v760
        %v838 = vunpack.c.l.b16 %v761
        %v839 = vunpack.c.h.b16 %v761
        %v840 = vunpack.c.l.b16 %v762
        %v841 = vunpack.c.h.b16 %v762
        %v842 = vunpack.c.l.b16 %v763
        %v843 = vunpack.c.h.b16 %v763
        %v844 = vunpack.c.l.b16 %v764
        %v845 = vunpack.c.h.b16 %v764
        %v846 = vunpack.c.l.b16 %v765
        %v847 = vunpack.c.h.b16 %v765
        %v848 = vunpack.c.l.b16 %v766
        %v849 = vunpack.c.h.b16 %v766
        %v850 = vunpack.c.l.b16 %v767
        %v851 = vunpack.c.h.b16 %v767
        %v852 = vunpack.c.l.b16 %v768
        %v853 = vunpack.c.h.b16 %v768
        %v854 = vunpack.c.l.b16 %v769
        %v855 = vunpack.c.h.b16 %v769
        %v856 = vunpack.c.l.b16 %v770
        %v857 = vunpack.c.h.b16 %v770
        %v858 = vunpack.c.l.b16 %v771
        %v859 = vunpack.c.h.b16 %v771
        %v860 = vunpack.c.l.b16 %v772
        %v861 = vunpack.c.h.b16 %v772
        %v862 = vunpack.c.l.b16 %v773
        %v863 = vunpack.c.h.b16 %v773
        %v864 = vunpack.c.l.b16 %v774
        %v865 = vunpack.c.h.b16 %v774
        %v866 = vunpack.c.l.b16 %v775
        %v867 = vunpack.c.h.b16 %v775
        %v868 = vunpack.c.l.b16 %v776
        %v869 = vunpack.c.h.b16 %v776
        %v870 = vunpack.c.l.b16 %v777
        %v871 = vunpack.c.h.b16 %v777
        %v872 = vunpack.c.l.b16 %v778
        %v873 = vunpack.c.h.b16 %v778
        %v874 = vunpack.c.l.b16 %v779
        %v875 = vunpack.c.h.b16 %v779
        %v876 = vunpack.c.l.b16 %v780
        %v877 = vunpack.c.h.b16 %v780
        %v878 = vunpack.c.l.b16 %v781
        %v879 = vunpack.c.h.b16 %v781
        %v880 = vunpack.c.l.b16 %v782
        %v881 = vunpack.c.h.b16 %v782
        %v882 = vunpack.c.l.b16 %v783
        %v883 = vunpack.c.h.b16 %v783
        %v884 = vunpack.c.l.b16 %v784
        %v885 = vunpack.c.h.b16 %v784
        %v886 = vunpack.c.l.b16 %v785
        %v887 = vunpack.c.h.b16 %v785
        %v888 = vunpack.c.l.b16 %v786
        %v889 = vunpack.c.h.b16 %v786
        %v890 = vunpack.c.l.b16 %v787
        %v891 = vunpack.c.h.b16 %v787
        %v892 = vunpack.c.l.b16 %v788
        %v893 = vunpack.c.h.b16 %v788
        %v894 = vpack.c.b16 %v834, %v830
        %v895 = vpack.c.b16 %v835, %v831
        %v896 = vpack.c.b16 %v836, %v832
        %v897 = vpack.c.b16 %v837, %v833
        %v898 = vpack.c.b16 %v842, %v838
        %v899 = vpack.c.b16 %v843, %v839
        %v900 = vpack.c.b16 %v844, %v840
        %v901 = vpack.c.b16 %v845, %v841
        %v902 = vpack.c.b16 %v850, %v846
        %v903 = vpack.c.b16 %v851, %v847
        %v904 = vpack.c.b16 %v852, %v848
        %v905 = vpack.c.b16 %v853, %v849
        %v906 = vpack.c.b16 %v858, %v854
        %v907 = vpack.c.b16 %v859, %v855
        %v908 = vpack.c.b16 %v860, %v856
        %v909 = vpack.c.b16 %v861, %v857
        %v910 = vpack.c.b16 %v866, %v862
        %v911 = vpack.c.b16 %v867, %v863
        %v912 = vpack.c.b16 %v868, %v864
        %v913 = vpack.c.b16 %v869, %v865
        %v914 = vpack.c.b16 %v874, %v870
        %v915 = vpack.c.b16 %v875, %v871
        %v916 = vpack.c.b16 %v876, %v872
        %v917 = vpack.c.b16 %v877, %v873
        %v918 = vpack.c.b16 %v882, %v878
        %v919 = vpack.c.b16 %v883, %v879
        %v920 = vpack.c.b16 %v884, %v880
        %v921 = vpack.c.b16 %v885, %v881
        %v922 = vpack.c.b16 %v890, %v886
        %v923 = vpack.c.b16 %v891, %v887
        %v924 = vpack.c.b16 %v892, %v888
        %v925 = vpack.c.b16 %v893, %v889
        %958 = vmatprep.subr.bf16.mxu0 %v923
        %959 = vmatpush1.bf16.msra.mxu0 %v922
        %960 = vmatprep.subr.bf16.mxu0 %v919
        %961 = vmatpush1.bf16.msra.mxu0 %v918
        %962 = vmatprep.subr.bf16.mxu0 %v915
        %963 = vmatpush1.bf16.msra.mxu0 %v914
        %964 = vmatprep.subr.bf16.mxu0 %v911
        %965 = vmatpush1.bf16.msra.mxu0 %v910
        %966 = vmatprep.subr.bf16.mxu0 %v907
        %967 = vmatpush1.bf16.msra.mxu0 %v906
        %968 = vmatprep.subr.bf16.mxu0 %v903
        %969 = vmatpush1.bf16.msra.mxu0 %v902
        %970 = vmatprep.subr.bf16.mxu0 %v899
        %971 = vmatpush1.bf16.msra.mxu0 %v898
        %972 = vmatprep.subr.bf16.mxu0 %v895
        %973 = vmatpush1.bf16.msra.mxu0 %v894
        %974 = vmatprep.subr.bf16.mxu0 0
        %975 = vmatpush2.bf16.msra.mxu0 0
        %976 = vmatprep.subr.bf16.mxu0 0
        %977 = vmatpush2.bf16.msra.mxu0 0
        %978 = vmatprep.subr.bf16.mxu0 0
        %979 = vmatpush2.bf16.msra.mxu0 0
        %980 = vmatprep.subr.bf16.mxu0 0
        %981 = vmatpush2.bf16.msra.mxu0 0
        %982 = vmatprep.subr.bf16.mxu0 0
        %983 = vmatpush2.bf16.msra.mxu0 0
        %984 = vmatprep.subr.bf16.mxu0 0
        %985 = vmatpush2.bf16.msra.mxu0 0
        %986 = vmatprep.subr.bf16.mxu0 0
        %987 = vmatpush2.bf16.msra.mxu0 0
        %988 = vmatprep.subr.bf16.mxu0 0
        %989 = vmatpush2.bf16.msra.mxu0 0
        %990 = vmatprep.mubr.bf16.mxu0 0
        %991 = vmatmul.mubr.bf16.gmra.mxu0 %v797
        %v992 = vpop.f32.mrf.mxu0
        %v993 = vadd.f32 0.0, %v992
        %v994 = vpop.f32.mrf.mxu0
        %v995 = vadd.f32 0.0, %v994
        %v996 = vpop.f32.mrf.mxu0
        %v997 = vpop.f32.mrf.mxu0
        %998 = vdwg.mxu0
        %999 = vmatprep.subr.bf16.mxu0 %v925
        %1000 = vmatpush1.bf16.msra.mxu0 %v924
        %1001 = vmatprep.subr.bf16.mxu0 %v921
        %1002 = vmatpush1.bf16.msra.mxu0 %v920
        %1003 = vmatprep.subr.bf16.mxu0 %v917
        %1004 = vmatpush1.bf16.msra.mxu0 %v916
        %1005 = vmatprep.subr.bf16.mxu0 %v913
        %1006 = vmatpush1.bf16.msra.mxu0 %v912
        %1007 = vmatprep.subr.bf16.mxu0 %v909
        %1008 = vmatpush1.bf16.msra.mxu0 %v908
        %1009 = vmatprep.subr.bf16.mxu0 %v905
        %1010 = vmatpush1.bf16.msra.mxu0 %v904
        %1011 = vmatprep.subr.bf16.mxu0 %v901
        %1012 = vmatpush1.bf16.msra.mxu0 %v900
        %1013 = vmatprep.subr.bf16.mxu0 %v897
        %1014 = vmatpush1.bf16.msra.mxu0 %v896
        %1015 = vmatprep.subr.bf16.mxu0 0
        %1016 = vmatpush2.bf16.msra.mxu0 0
        %1017 = vmatprep.subr.bf16.mxu0 0
        %1018 = vmatpush2.bf16.msra.mxu0 0
        %1019 = vmatprep.subr.bf16.mxu0 0
        %1020 = vmatpush2.bf16.msra.mxu0 0
        %1021 = vmatprep.subr.bf16.mxu0 0
        %1022 = vmatpush2.bf16.msra.mxu0 0
        %1023 = vmatprep.subr.bf16.mxu0 0
        %1024 = vmatpush2.bf16.msra.mxu0 0
        %1025 = vmatprep.subr.bf16.mxu0 0
        %1026 = vmatpush2.bf16.msra.mxu0 0
        %1027 = vmatprep.subr.bf16.mxu0 0
        %1028 = vmatpush2.bf16.msra.mxu0 0
        %1029 = vmatprep.subr.bf16.mxu0 0
        %1030 = vmatpush2.bf16.msra.mxu0 0
        %1031 = vmatprep.mubr.bf16.mxu0 0
        %1032 = vmatmul.mubr.bf16.gmra.mxu0 %v797
        %v1033 = vpop.f32.mrf.mxu0
        %v1034 = vadd.f32 0.0, %v1033
        %v1035 = vpop.f32.mrf.mxu0
        %v1036 = vadd.f32 0.0, %v1035
        %v1037 = vpop.f32.mrf.mxu0
        %v1038 = vpop.f32.mrf.mxu0
        %1039 = vdwg.mxu0
        %v1040 = vadd.f32 %v793, %v993
        %v1041 = vadd.f32 %v794, %v995
        %v1042 = vadd.f32 %v795, %v1034
        %v1043 = vadd.f32 %v796, %v1036
        %v1044 = vxor.u32 %v1040, 2147483648
        %v1045 = vmul.f32 %v1044, 1.442695
        %v1046 = vpow.pop %v1045
        %v1047 = vadd.f32 %v1046, 1.0
        %v1048 = vrcp.pop %v1047
        %v1049 = vmul.f32 1.0, %v1048
        %v1050 = vxor.u32 %v1041, 2147483648
        %v1051 = vmul.f32 %v1050, 1.442695
        %v1052 = vpow.pop %v1051
        %v1053 = vadd.f32 %v1052, 1.0
        %v1054 = vrcp.pop %v1053
        %v1055 = vmul.f32 1.0, %v1054
        %v1056 = vtanh.pop %v1042
        %v1057 = vxor.u32 %v1043, 2147483648
        %v1058 = vmul.f32 %v1057, 1.442695
        %v1059 = vpow.pop %v1058
        %v1060 = vadd.f32 %v1059, 1.0
        %v1061 = vrcp.pop %v1060
        %v1062 = vmul.f32 1.0, %v1061
        %v1063 = vmul.f32 %v1049, %v790
        %v1064 = vmul.f32 %v1055, %v792
        %v1065 = vadd.f32 %v1063, %v1064
        %v1066 = vsub.f32 %v1065, %v1062
        %vm1067 = vcmp.ge.f32.partialorder %v1066, 0.0
        %v1068 = vsel %vm1067, 1, 0
        %v1069 = vcvt.s32.f32 %v1068
        %v1070 = vpack.c.bf16 %v1069, %v1069
        %1071 = vst [vmem:[%s380] sm:$0xf] %v1070
        %v1072 = vsub.f32 1.0, %v1069
        %v1073 = vmul.f32 %v1072, %v1065
        %v1074 = vmul.f32 %v1069, %v789
        %v1075 = vadd.f32 %v1073, %v1074
        %v1076 = vadd.f32 %v1075, %v1056
        %s1077 = scalar_lea.vmem %s346, 4 [#allocation4]
        %v1078 = vld [vmem:[%s1077] sm:$0xf]
        %v1079 = vunpack.c.l.bf16 %v1078
        %s1080 = scalar_lea.vmem [#allocation3], 32
        %v1081 = vld [vmem:[%s1080] sm:$0xff]
        %v1082 = vld [vmem:[%s1080 + $0x8] sm:$0xff]
        %v1083 = vld [vmem:[%s1080 + $0x10] sm:$0xff]
        %v1084 = vld [vmem:[%s1080 + $0x18] sm:$0xff]
        %v1085 = vpack.c.bf16 %v1076, %v1076
        %1086 = vmatprep.subr.bf16.mxu0 %v923
        %1087 = vmatpush1.bf16.msra.mxu0 %v922
        %1088 = vmatprep.subr.bf16.mxu0 %v919
        %1089 = vmatpush1.bf16.msra.mxu0 %v918
        %1090 = vmatprep.subr.bf16.mxu0 %v915
        %1091 = vmatpush1.bf16.msra.mxu0 %v914
        %1092 = vmatprep.subr.bf16.mxu0 %v911
        %1093 = vmatpush1.bf16.msra.mxu0 %v910
        %1094 = vmatprep.subr.bf16.mxu0 %v907
        %1095 = vmatpush1.bf16.msra.mxu0 %v906
        %1096 = vmatprep.subr.bf16.mxu0 %v903
        %1097 = vmatpush1.bf16.msra.mxu0 %v902
        %1098 = vmatprep.subr.bf16.mxu0 %v899
        %1099 = vmatpush1.bf16.msra.mxu0 %v898
        %1100 = vmatprep.subr.bf16.mxu0 %v895
        %1101 = vmatpush1.bf16.msra.mxu0 %v894
        %1102 = vmatprep.subr.bf16.mxu0 0
        %1103 = vmatpush2.bf16.msra.mxu0 0
        %1104 = vmatprep.subr.bf16.mxu0 0
        %1105 = vmatpush2.bf16.msra.mxu0 0
        %1106 = vmatprep.subr.bf16.mxu0 0
        %1107 = vmatpush2.bf16.msra.mxu0 0
        %1108 = vmatprep.subr.bf16.mxu0 0
        %1109 = vmatpush2.bf16.msra.mxu0 0
        %1110 = vmatprep.subr.bf16.mxu0 0
        %1111 = vmatpush2.bf16.msra.mxu0 0
        %1112 = vmatprep.subr.bf16.mxu0 0
        %1113 = vmatpush2.bf16.msra.mxu0 0
        %1114 = vmatprep.subr.bf16.mxu0 0
        %1115 = vmatpush2.bf16.msra.mxu0 0
        %1116 = vmatprep.subr.bf16.mxu0 0
        %1117 = vmatpush2.bf16.msra.mxu0 0
        %1118 = vmatprep.mubr.bf16.mxu0 0
        %1119 = vmatmul.mubr.bf16.gmra.mxu0 %v1085
        %v1120 = vpop.f32.mrf.mxu0
        %v1121 = vadd.f32 0.0, %v1120
        %v1122 = vpop.f32.mrf.mxu0
        %v1123 = vadd.f32 0.0, %v1122
        %v1124 = vpop.f32.mrf.mxu0
        %v1125 = vpop.f32.mrf.mxu0
        %1126 = vdwg.mxu0
        %1127 = vmatprep.subr.bf16.mxu0 %v925
        %1128 = vmatpush1.bf16.msra.mxu0 %v924
        %1129 = vmatprep.subr.bf16.mxu0 %v921
        %1130 = vmatpush1.bf16.msra.mxu0 %v920
        %1131 = vmatprep.subr.bf16.mxu0 %v917
        %1132 = vmatpush1.bf16.msra.mxu0 %v916
        %1133 = vmatprep.subr.bf16.mxu0 %v913
        %1134 = vmatpush1.bf16.msra.mxu0 %v912
        %1135 = vmatprep.subr.bf16.mxu0 %v909
        %1136 = vmatpush1.bf16.msra.mxu0 %v908
        %1137 = vmatprep.subr.bf16.mxu0 %v905
        %1138 = vmatpush1.bf16.msra.mxu0 %v904
        %1139 = vmatprep.subr.bf16.mxu0 %v901
        %1140 = vmatpush1.bf16.msra.mxu0 %v900
        %1141 = vmatprep.subr.bf16.mxu0 %v897
        %1142 = vmatpush1.bf16.msra.mxu0 %v896
        %1143 = vmatprep.subr.bf16.mxu0 0
        %1144 = vmatpush2.bf16.msra.mxu0 0
        %1145 = vmatprep.subr.bf16.mxu0 0
        %1146 = vmatpush2.bf16.msra.mxu0 0
        %1147 = vmatprep.subr.bf16.mxu0 0
        %1148 = vmatpush2.bf16.msra.mxu0 0
        %1149 = vmatprep.subr.bf16.mxu0 0
        %1150 = vmatpush2.bf16.msra.mxu0 0
        %1151 = vmatprep.subr.bf16.mxu0 0
        %1152 = vmatpush2.bf16.msra.mxu0 0
        %1153 = vmatprep.subr.bf16.mxu0 0
        %1154 = vmatpush2.bf16.msra.mxu0 0
        %1155 = vmatprep.subr.bf16.mxu0 0
        %1156 = vmatpush2.bf16.msra.mxu0 0
        %1157 = vmatprep.subr.bf16.mxu0 0
        %1158 = vmatpush2.bf16.msra.mxu0 0
        %1159 = vmatprep.mubr.bf16.mxu0 0
        %1160 = vmatmul.mubr.bf16.gmra.mxu0 %v1085
        %v1161 = vpop.f32.mrf.mxu0
        %v1162 = vadd.f32 0.0, %v1161
        %v1163 = vpop.f32.mrf.mxu0
        %v1164 = vadd.f32 0.0, %v1163
        %v1165 = vpop.f32.mrf.mxu0
        %v1166 = vpop.f32.mrf.mxu0
        %1167 = vdwg.mxu0
        %v1168 = vadd.f32 %v1081, %v1121
        %v1169 = vadd.f32 %v1082, %v1123
        %v1170 = vadd.f32 %v1083, %v1162
        %v1171 = vadd.f32 %v1084, %v1164
        %v1172 = vxor.u32 %v1168, 2147483648
        %v1173 = vmul.f32 %v1172, 1.442695
        %v1174 = vpow.pop %v1173
        %v1175 = vadd.f32 %v1174, 1.0
        %v1176 = vrcp.pop %v1175
        %v1177 = vmul.f32 1.0, %v1176
        %v1178 = vxor.u32 %v1169, 2147483648
        %v1179 = vmul.f32 %v1178, 1.442695
        %v1180 = vpow.pop %v1179
        %v1181 = vadd.f32 %v1180, 1.0
        %v1182 = vrcp.pop %v1181
        %v1183 = vmul.f32 1.0, %v1182
        %v1184 = vtanh.pop %v1170
        %v1185 = vxor.u32 %v1171, 2147483648
        %v1186 = vmul.f32 %v1185, 1.442695
        %v1187 = vpow.pop %v1186
        %v1188 = vadd.f32 %v1187, 1.0
        %v1189 = vrcp.pop %v1188
        %v1190 = vmul.f32 1.0, %v1189
        %v1191 = vmul.f32 %v1177, %v1076
        %v1192 = vmul.f32 %v1183, %v1079
        %v1193 = vadd.f32 %v1191, %v1192
        %v1194 = vsub.f32 %v1193, %v1190
        %vm1195 = vcmp.ge.f32.partialorder %v1194, 0.0
        %v1196 = vsel %vm1195, 1, 0
        %v1197 = vcvt.s32.f32 %v1196
        %v1198 = vpack.c.bf16 %v1197, %v1197
        %s1199 = scalar_lea.vmem %s380, 4 [#allocation5]
        %1200 = vst [vmem:[%s1199] sm:$0xf] %v1198
        %v1201 = vsub.f32 1.0, %v1197
        %v1202 = vmul.f32 %v1201, %v1193
        %v1203 = vmul.f32 %v1197, %v789
        %v1204 = vadd.f32 %v1202, %v1203
        %v1205 = vadd.f32 %v1204, %v1184
        %s1206 = scalar_lea.vmem %s346, 8 [#allocation4]
        %v1207 = vld [vmem:[%s1206] sm:$0xf]
        %v1208 = vunpack.c.l.bf16 %v1207
        %s1209 = scalar_lea.vmem [#allocation3], 64
        %v1210 = vld [vmem:[%s1209] sm:$0xff]
        %v1211 = vld [vmem:[%s1209 + $0x8] sm:$0xff]
        %v1212 = vld [vmem:[%s1209 + $0x10] sm:$0xff]
        %v1213 = vld [vmem:[%s1209 + $0x18] sm:$0xff]
        %v1214 = vpack.c.bf16 %v1205, %v1205
        %1215 = vmatprep.subr.bf16.mxu0 %v923
        %1216 = vmatpush1.bf16.msra.mxu0 %v922
        %1217 = vmatprep.subr.bf16.mxu0 %v919
        %1218 = vmatpush1.bf16.msra.mxu0 %v918
        %1219 = vmatprep.subr.bf16.mxu0 %v915
        %1220 = vmatpush1.bf16.msra.mxu0 %v914
        %1221 = vmatprep.subr.bf16.mxu0 %v911
        %1222 = vmatpush1.bf16.msra.mxu0 %v910
        %1223 = vmatprep.subr.bf16.mxu0 %v907
        %1224 = vmatpush1.bf16.msra.mxu0 %v906
        %1225 = vmatprep.subr.bf16.mxu0 %v903
        %1226 = vmatpush1.bf16.msra.mxu0 %v902
        %1227 = vmatprep.subr.bf16.mxu0 %v899
        %1228 = vmatpush1.bf16.msra.mxu0 %v898
        %1229 = vmatprep.subr.bf16.mxu0 %v895
        %1230 = vmatpush1.bf16.msra.mxu0 %v894
        %1231 = vmatprep.subr.bf16.mxu0 0
        %1232 = vmatpush2.bf16.msra.mxu0 0
        %1233 = vmatprep.subr.bf16.mxu0 0
        %1234 = vmatpush2.bf16.msra.mxu0 0
        %1235 = vmatprep.subr.bf16.mxu0 0
        %1236 = vmatpush2.bf16.msra.mxu0 0
        %1237 = vmatprep.subr.bf16.mxu0 0
        %1238 = vmatpush2.bf16.msra.mxu0 0
        %1239 = vmatprep.subr.bf16.mxu0 0
        %1240 = vmatpush2.bf16.msra.mxu0 0
        %1241 = vmatprep.subr.bf16.mxu0 0
        %1242 = vmatpush2.bf16.msra.mxu0 0
        %1243 = vmatprep.subr.bf16.mxu0 0
        %1244 = vmatpush2.bf16.msra.mxu0 0
        %1245 = vmatprep.subr.bf16.mxu0 0
        %1246 = vmatpush2.bf16.msra.mxu0 0
        %1247 = vmatprep.mubr.bf16.mxu0 0
        %1248 = vmatmul.mubr.bf16.gmra.mxu0 %v1214
        %v1249 = vpop.f32.mrf.mxu0
        %v1250 = vadd.f32 0.0, %v1249
        %v1251 = vpop.f32.mrf.mxu0
        %v1252 = vadd.f32 0.0, %v1251
        %v1253 = vpop.f32.mrf.mxu0
        %v1254 = vpop.f32.mrf.mxu0
        %1255 = vdwg.mxu0
        %1256 = vmatprep.subr.bf16.mxu0 %v925
        %1257 = vmatpush1.bf16.msra.mxu0 %v924
        %1258 = vmatprep.subr.bf16.mxu0 %v921
        %1259 = vmatpush1.bf16.msra.mxu0 %v920
        %1260 = vmatprep.subr.bf16.mxu0 %v917
        %1261 = vmatpush1.bf16.msra.mxu0 %v916
        %1262 = vmatprep.subr.bf16.mxu0 %v913
        %1263 = vmatpush1.bf16.msra.mxu0 %v912
        %1264 = vmatprep.subr.bf16.mxu0 %v909
        %1265 = vmatpush1.bf16.msra.mxu0 %v908
        %1266 = vmatprep.subr.bf16.mxu0 %v905
        %1267 = vmatpush1.bf16.msra.mxu0 %v904
        %1268 = vmatprep.subr.bf16.mxu0 %v901
        %1269 = vmatpush1.bf16.msra.mxu0 %v900
        %1270 = vmatprep.subr.bf16.mxu0 %v897
        %1271 = vmatpush1.bf16.msra.mxu0 %v896
        %1272 = vmatprep.subr.bf16.mxu0 0
        %1273 = vmatpush2.bf16.msra.mxu0 0
        %1274 = vmatprep.subr.bf16.mxu0 0
        %1275 = vmatpush2.bf16.msra.mxu0 0
        %1276 = vmatprep.subr.bf16.mxu0 0
        %1277 = vmatpush2.bf16.msra.mxu0 0
        %1278 = vmatprep.subr.bf16.mxu0 0
        %1279 = vmatpush2.bf16.msra.mxu0 0
        %1280 = vmatprep.subr.bf16.mxu0 0
        %1281 = vmatpush2.bf16.msra.mxu0 0
        %1282 = vmatprep.subr.bf16.mxu0 0
        %1283 = vmatpush2.bf16.msra.mxu0 0
        %1284 = vmatprep.subr.bf16.mxu0 0
        %1285 = vmatpush2.bf16.msra.mxu0 0
        %1286 = vmatprep.subr.bf16.mxu0 0
        %1287 = vmatpush2.bf16.msra.mxu0 0
        %1288 = vmatprep.mubr.bf16.mxu0 0
        %1289 = vmatmul.mubr.bf16.gmra.mxu0 %v1214
        %v1290 = vpop.f32.mrf.mxu0
        %v1291 = vadd.f32 0.0, %v1290
        %v1292 = vpop.f32.mrf.mxu0
        %v1293 = vadd.f32 0.0, %v1292
        %v1294 = vpop.f32.mrf.mxu0
        %v1295 = vpop.f32.mrf.mxu0
        %1296 = vdwg.mxu0
        %v1297 = vadd.f32 %v1210, %v1250
        %v1298 = vadd.f32 %v1211, %v1252
        %v1299 = vadd.f32 %v1212, %v1291
        %v1300 = vadd.f32 %v1213, %v1293
        %v1301 = vxor.u32 %v1297, 2147483648
        %v1302 = vmul.f32 %v1301, 1.442695
        %v1303 = vpow.pop %v1302
        %v1304 = vadd.f32 %v1303, 1.0
        %v1305 = vrcp.pop %v1304
        %v1306 = vmul.f32 1.0, %v1305
        %v1307 = vxor.u32 %v1298, 2147483648
        %v1308 = vmul.f32 %v1307, 1.442695
        %v1309 = vpow.pop %v1308
        %v1310 = vadd.f32 %v1309, 1.0
        %v1311 = vrcp.pop %v1310
        %v1312 = vmul.f32 1.0, %v1311
        %v1313 = vtanh.pop %v1299
        %v1314 = vxor.u32 %v1300, 2147483648
        %v1315 = vmul.f32 %v1314, 1.442695
        %v1316 = vpow.pop %v1315
        %v1317 = vadd.f32 %v1316, 1.0
        %v1318 = vrcp.pop %v1317
        %v1319 = vmul.f32 1.0, %v1318
        %v1320 = vmul.f32 %v1306, %v1205
        %v1321 = vmul.f32 %v1312, %v1208
        %v1322 = vadd.f32 %v1320, %v1321
        %v1323 = vsub.f32 %v1322, %v1319
        %vm1324 = vcmp.ge.f32.partialorder %v1323, 0.0
        %v1325 = vsel %vm1324, 1, 0
        %v1326 = vcvt.s32.f32 %v1325
        %v1327 = vpack.c.bf16 %v1326, %v1326
        %s1328 = scalar_lea.vmem %s380, 8 [#allocation5]
        %1329 = vst [vmem:[%s1328] sm:$0xf] %v1327
        %v1330 = vsub.f32 1.0, %v1326
        %v1331 = vmul.f32 %v1330, %v1322
        %v1332 = vmul.f32 %v1326, %v789
        %v1333 = vadd.f32 %v1331, %v1332
        %v1334 = vadd.f32 %v1333, %v1313
        %s1335 = scalar_lea.vmem %s346, 12 [#allocation4]
        %v1336 = vld [vmem:[%s1335] sm:$0xf]
        %v1337 = vunpack.c.l.bf16 %v1336
        %s1338 = scalar_lea.vmem [#allocation3], 96
        %v1339 = vld [vmem:[%s1338] sm:$0xff]
        %v1340 = vld [vmem:[%s1338 + $0x8] sm:$0xff]
        %v1341 = vld [vmem:[%s1338 + $0x10] sm:$0xff]
        %v1342 = vld [vmem:[%s1338 + $0x18] sm:$0xff]
        %v1343 = vpack.c.bf16 %v1334, %v1334
        %1344 = vmatprep.subr.bf16.mxu0 %v923
        %1345 = vmatpush1.bf16.msra.mxu0 %v922
        %1346 = vmatprep.subr.bf16.mxu0 %v919
        %1347 = vmatpush1.bf16.msra.mxu0 %v918
        %1348 = vmatprep.subr.bf16.mxu0 %v915
        %1349 = vmatpush1.bf16.msra.mxu0 %v914
        %1350 = vmatprep.subr.bf16.mxu0 %v911
        %1351 = vmatpush1.bf16.msra.mxu0 %v910
        %1352 = vmatprep.subr.bf16.mxu0 %v907
        %1353 = vmatpush1.bf16.msra.mxu0 %v906
        %1354 = vmatprep.subr.bf16.mxu0 %v903
        %1355 = vmatpush1.bf16.msra.mxu0 %v902
        %1356 = vmatprep.subr.bf16.mxu0 %v899
        %1357 = vmatpush1.bf16.msra.mxu0 %v898
        %1358 = vmatprep.subr.bf16.mxu0 %v895
        %1359 = vmatpush1.bf16.msra.mxu0 %v894
        %1360 = vmatprep.subr.bf16.mxu0 0
        %1361 = vmatpush2.bf16.msra.mxu0 0
        %1362 = vmatprep.subr.bf16.mxu0 0
        %1363 = vmatpush2.bf16.msra.mxu0 0
        %1364 = vmatprep.subr.bf16.mxu0 0
        %1365 = vmatpush2.bf16.msra.mxu0 0
        %1366 = vmatprep.subr.bf16.mxu0 0
        %1367 = vmatpush2.bf16.msra.mxu0 0
        %1368 = vmatprep.subr.bf16.mxu0 0
        %1369 = vmatpush2.bf16.msra.mxu0 0
        %1370 = vmatprep.subr.bf16.mxu0 0
        %1371 = vmatpush2.bf16.msra.mxu0 0
        %1372 = vmatprep.subr.bf16.mxu0 0
        %1373 = vmatpush2.bf16.msra.mxu0 0
        %1374 = vmatprep.subr.bf16.mxu0 0
        %1375 = vmatpush2.bf16.msra.mxu0 0
        %1376 = vmatprep.mubr.bf16.mxu0 0
        %1377 = vmatmul.mubr.bf16.gmra.mxu0 %v1343
        %v1378 = vpop.f32.mrf.mxu0
        %v1379 = vadd.f32 0.0, %v1378
        %v1380 = vpop.f32.mrf.mxu0
        %v1381 = vadd.f32 0.0, %v1380
        %v1382 = vpop.f32.mrf.mxu0
        %v1383 = vpop.f32.mrf.mxu0
        %1384 = vdwg.mxu0
        %1385 = vmatprep.subr.bf16.mxu0 %v925
        %1386 = vmatpush1.bf16.msra.mxu0 %v924
        %1387 = vmatprep.subr.bf16.mxu0 %v921
        %1388 = vmatpush1.bf16.msra.mxu0 %v920
        %1389 = vmatprep.subr.bf16.mxu0 %v917
        %1390 = vmatpush1.bf16.msra.mxu0 %v916
        %1391 = vmatprep.subr.bf16.mxu0 %v913
        %1392 = vmatpush1.bf16.msra.mxu0 %v912
        %1393 = vmatprep.subr.bf16.mxu0 %v909
        %1394 = vmatpush1.bf16.msra.mxu0 %v908
        %1395 = vmatprep.subr.bf16.mxu0 %v905
        %1396 = vmatpush1.bf16.msra.mxu0 %v904
        %1397 = vmatprep.subr.bf16.mxu0 %v901
        %1398 = vmatpush1.bf16.msra.mxu0 %v900
        %1399 = vmatprep.subr.bf16.mxu0 %v897
        %1400 = vmatpush1.bf16.msra.mxu0 %v896
        %1401 = vmatprep.subr.bf16.mxu0 0
        %1402 = vmatpush2.bf16.msra.mxu0 0
        %1403 = vmatprep.subr.bf16.mxu0 0
        %1404 = vmatpush2.bf16.msra.mxu0 0
        %1405 = vmatprep.subr.bf16.mxu0 0
        %1406 = vmatpush2.bf16.msra.mxu0 0
        %1407 = vmatprep.subr.bf16.mxu0 0
        %1408 = vmatpush2.bf16.msra.mxu0 0
        %1409 = vmatprep.subr.bf16.mxu0 0
        %1410 = vmatpush2.bf16.msra.mxu0 0
        %1411 = vmatprep.subr.bf16.mxu0 0
        %1412 = vmatpush2.bf16.msra.mxu0 0
        %1413 = vmatprep.subr.bf16.mxu0 0
        %1414 = vmatpush2.bf16.msra.mxu0 0
        %1415 = vmatprep.subr.bf16.mxu0 0
        %1416 = vmatpush2.bf16.msra.mxu0 0
        %1417 = vmatprep.mubr.bf16.mxu0 0
        %1418 = vmatmul.mubr.bf16.gmra.mxu0 %v1343
        %v1419 = vpop.f32.mrf.mxu0
        %v1420 = vadd.f32 0.0, %v1419
        %v1421 = vpop.f32.mrf.mxu0
        %v1422 = vadd.f32 0.0, %v1421
        %v1423 = vpop.f32.mrf.mxu0
        %v1424 = vpop.f32.mrf.mxu0
        %1425 = vdwg.mxu0
        %v1426 = vadd.f32 %v1339, %v1379
        %v1427 = vadd.f32 %v1340, %v1381
        %v1428 = vadd.f32 %v1341, %v1420
        %v1429 = vadd.f32 %v1342, %v1422
        %v1430 = vxor.u32 %v1426, 2147483648
        %v1431 = vmul.f32 %v1430, 1.442695
        %v1432 = vpow.pop %v1431
        %v1433 = vadd.f32 %v1432, 1.0
        %v1434 = vrcp.pop %v1433
        %v1435 = vmul.f32 1.0, %v1434
        %v1436 = vxor.u32 %v1427, 2147483648
        %v1437 = vmul.f32 %v1436, 1.442695
        %v1438 = vpow.pop %v1437
        %v1439 = vadd.f32 %v1438, 1.0
        %v1440 = vrcp.pop %v1439
        %v1441 = vmul.f32 1.0, %v1440
        %v1442 = vtanh.pop %v1428
        %v1443 = vxor.u32 %v1429, 2147483648
        %v1444 = vmul.f32 %v1443, 1.442695
        %v1445 = vpow.pop %v1444
        %v1446 = vadd.f32 %v1445, 1.0
        %v1447 = vrcp.pop %v1446
        %v1448 = vmul.f32 1.0, %v1447
        %v1449 = vmul.f32 %v1435, %v1334
        %v1450 = vmul.f32 %v1441, %v1337
        %v1451 = vadd.f32 %v1449, %v1450
        %v1452 = vsub.f32 %v1451, %v1448
        %vm1453 = vcmp.ge.f32.partialorder %v1452, 0.0
        %v1454 = vsel %vm1453, 1, 0
        %v1455 = vcvt.s32.f32 %v1454
        %v1456 = vpack.c.bf16 %v1455, %v1455
        %s1457 = scalar_lea.vmem %s380, 12 [#allocation5]
        %1458 = vst [vmem:[%s1457] sm:$0xf] %v1456
        %v1459 = vsub.f32 1.0, %v1455
        %v1460 = vmul.f32 %v1459, %v1451
        %v1461 = vmul.f32 %v1455, %v789
        %v1462 = vadd.f32 %v1460, %v1461
        %v1463 = vadd.f32 %v1462, %v1442
        %1464 = vst [vmem:[#allocation2] sm:$0xff] %v1463
        %p1465 = scmp.eq.s32.totalorder %s30, 1
        // Predicated region
        $region90: #{gpn_forward.1} parent=80 // pred_check
          %p1466 = pneg %p1465
        $region91: #{gpn_forward.1} parent=80 // pred_check_branch
          %1468 = sbr.rel (%p1466) target = $region93
        $region92: #{gpn_forward.1} parent=80 // pred_region
          %1469 = vst [vmem:[%s387] sm:$0xff] %v1463
        $region93: #{gpn_forward.1} parent=80 // pred_fallthru
          _
        %s1470 = sand.u32 %s190, 1
        %s1471 = scalar_lea.sflag [#allocation6], %s1470
        %s1472 = sand.u32 %s190, 1
        %s1473 = smul.addr %s1472, 16
        %s1474 = scalar_lea.vmem [#allocation5], %s1473
        %s1475 = sand.u32 %s216, 1
        %s1476 = scalar_lea.sflag [#allocation8], %s1475
        %s1477 = sand.u32 %s216, 1
        %s1478 = smul.addr %s1477, 8
        %s1479 = scalar_lea.vmem [#allocation7], %s1478
        // Predicated region
        $region94: #{gpn_forward.1} parent=80 // pred_check
          %p1480 = pneg %p200
        $region95: #{gpn_forward.1} parent=80 // pred_check_branch
          %1482 = sbr.rel (%p1480) target = $region97
        $region96: #{gpn_forward.1} parent=80 // pred_region
          %s1483 = smul.u32 4, %s30
          %s1485 = ssub.s32 256, 256
          %1486 = vsyncadd %s1471, %s1485
          %s1487 = smul.addr %s1483, 2
          %s1488 = sadd.s32 %s29, %s1487
          %s1489 = smul.addr %s1488, 64
          %s1490 = scalar_lea.hbm %s6, %s1489
          %s1491 = sshll.u32 %s1474, 4
          %s1492 = int_to_ptr.vmem [resolvable:$true] %s1491
          %1497 = dma.vmem_to_hbm [thread:$0]  %s1492, 256, %s1490, %s1471, 64, 128, 4
        $region97: #{gpn_forward.1} parent=80 // pred_fallthru
          _
        // Predicated region
        $region98: #{gpn_forward.1} parent=80 // pred_check
          %p1498 = pneg %p226
        $region99: #{gpn_forward.1} parent=80 // pred_check_branch
          %1500 = sbr.rel (%p1498) target = $region101
        $region100: #{gpn_forward.1} parent=80 // pred_region
          %s1502 = ssub.s32 128, 128
          %1503 = vsyncadd %s1476, %s1502
          %s1504 = smul.addr %s29, 128
          %s1505 = scalar_lea.hbm %s7, %s1504
          %s1507 = sshll.u32 %s1479, 4
          %s1508 = int_to_ptr.vmem [resolvable:$true] %s1507
          %1510 = dma.vmem_to_hbm [thread:$0]  %s1508, 128, %s1505, %s1476
        $region101: #{gpn_forward.1} parent=80 // pred_fallthru
          _
      $region81: #{gpn_forward.1} parent=5 // pred_fallthru
        _
      %p1511 = scmp.le.s32.totalorder 2, %s20
      // Predicated region
      $region102: #{gpn_forward.1} parent=5 // pred_check
        %p1512 = pneg %p1511
      $region103: #{gpn_forward.1} parent=5 // pred_check_branch
        %1514 = sbr.rel (%p1512) target = $region105
      $region104: #{gpn_forward.1} parent=5 // pred_region
        %s1515 = ssub.s32 %s20, 2
        // Predicated region
        $region106: #{gpn_forward.1} parent=104 // pred_check
          %p1516 = pneg %p206
        $region107: #{gpn_forward.1} parent=104 // pred_check_branch
          %1518 = sbr.rel (%p1516) target = $region109
        $region108: #{gpn_forward.1} parent=104 // pred_region
          %s1519 = sand.u32 %s191, 1
          %s1520 = scalar_lea.sflag [#allocation6], %s1519
          %s1521 = sand.u32 %s191, 1
          %s1522 = smul.addr %s1521, 16
          %s1523 = scalar_lea.vmem [#allocation5], %s1522
          %1524 = dma.done %s1520, 256
        $region109: #{gpn_forward.1} parent=104 // pred_fallthru
          _
        // Predicated region
        $region110: #{gpn_forward.1} parent=104 // pred_check
          %p1525 = pneg %p232
        $region111: #{gpn_forward.1} parent=104 // pred_check_branch
          %1527 = sbr.rel (%p1525) target = $region113
        $region112: #{gpn_forward.1} parent=104 // pred_region
          %s1528 = sand.u32 %s217, 1
          %s1529 = scalar_lea.sflag [#allocation8], %s1528
          %s1530 = sand.u32 %s217, 1
          %s1531 = smul.addr %s1530, 8
          %s1532 = scalar_lea.vmem [#allocation7], %s1531
          %1533 = dma.done %s1529, 128
        $region113: #{gpn_forward.1} parent=104 // pred_fallthru
          _
      $region105: #{gpn_forward.1} parent=5 // pred_fallthru
        _
    $region6: #{gpn_forward.1} parent=1 // loop_footer
      %s24 = sadd.s32 1, %s20
    $region7: #{gpn_forward.1} parent=1 // loop_footer_branch
      %19 = sbr.rel target = $region3
    $region8: #{gpn_forward.1} parent=1 // loop_exit
      _
    %1534 = vsyncpa [#allocation6], 1
    %s1535 = scalar_lea.sflag [#allocation6], 1
    %1536 = vsyncpa %s1535, 1
    %1537 = vsyncpa [#allocation8], 1
    %s1538 = scalar_lea.sflag [#allocation8], 1
    %1539 = vsyncpa %s1538, 1

</llo_original>
